<compile_context>
chip_gen: v7x
topology: tpu7x:2x2x1
jax: 0.10.0
libtpu: 0.0.40
codegen_flags: <defaults>
</compile_context>

<pallas_src>
import jax
import jax.numpy as jnp
from jax import lax
from jax.experimental import pallas as pl
from jax.experimental.pallas import tpu as pltpu

LN_EPS = 1e-5  # torch.nn.LayerNorm default eps


def _round_up(x, m):
    return ((x + m - 1) // m) * m


def _device_kind():
    try:
        return jax.devices()[0].device_kind.lower()
    except Exception:
        return ""


def _is_v5e(kind):
    return ("v5 lite" in kind) or ("v5e" in kind) or ("v5litepod" in kind)


def _vmem_cap_bytes():
    try:
        return int(pltpu.get_tpu_info().vmem_capacity_bytes)
    except Exception:
        return 64 << 20  # conservative: v7x per-core physical VMEM


def _make_rnn_kernel(T: int, b_tile: int):
    def kernel(x_ref, w_ih_ref, w_hh_ref, b_h_ref, w_lin_ref, b_lin_ref,
               emb_wT_ref, out_ref, xw_ref, hs_ref, y_ref):
        # x_ref:      (R, E)   time-major embedded rows, R = T*b_tile
        # w_ih_ref:   (E, H)   W_ih^T
        # w_hh_ref:   (H, H)   W_hh^T (rec_dtype)
        # b_h_ref:    (1, H)   b_ih + b_hh
        # w_lin_ref:  (H, E)   W_lin^T
        # b_lin_ref:  (1, E)
        # emb_wT_ref: (E, Vt)  current V tile of embedding.weight^T
        # out_ref:    (R, Vt)
        # xw_ref:     (R, H)   VMEM scratch, input contribution
        # hs_ref:     (R, H)   VMEM scratch, all hidden states
        # y_ref:      (R, E)   VMEM scratch, Linear+ReLU output (mm_dtype)

        # Everything except the final projection runs once per batch tile
        # (first V step); later V steps only re-read y_ref.
        @pl.when(pl.program_id(1) == 0)
        def _prologue():
            x = x_ref[...].astype(jnp.float32)
            # LayerNorm over E (elementwise_affine=False, biased var, eps=1e-5)
            mean = jnp.mean(x, axis=-1, keepdims=True)
            xc = x - mean
            var = jnp.mean(xc * xc, axis=-1, keepdims=True)
            x_norm = xc * lax.rsqrt(var + LN_EPS)                    # (R, E) f32

            # Input contribution for ALL (t, b) rows in one MXU call, parked in
            # VMEM (not vregs) so the unrolled recurrence doesn't spill.
            xw_ref[...] = (jnp.dot(x_norm.astype(w_ih_ref.dtype), w_ih_ref[...],
                                   preferred_element_type=jnp.float32)
                           + b_h_ref[...])                           # (R, H) f32

            w_hh = w_hh_ref[...]
            h = jnp.zeros((b_tile, w_hh.shape[0]), jnp.float32)

            if T <= 16:
                # Full unroll for short sequences; xt comes from VMEM with
                # static aligned offsets, hidden-state stores are unmasked
                # (b_tile, H) tiles off the serial dependency chain.
                for t in range(T):
                    xt = xw_ref[pl.ds(t * b_tile, b_tile), :]
                    h = jnp.tanh(xt + jnp.dot(h.astype(w_hh.dtype), w_hh,
                                              preferred_element_type=jnp.float32))
                    hs_ref[pl.ds(t * b_tile, b_tile), :] = h
            else:
                # Partial unroll bounds live ranges / code size for long T.
                def body(t, h):
                    off = pl.multiple_of(t * b_tile, b_tile)
                    xt = xw_ref[pl.ds(off, b_tile), :]
                    h = jnp.tanh(xt + jnp.dot(h.astype(w_hh.dtype), w_hh,
                                              preferred_element_type=jnp.float32))
                    hs_ref[pl.ds(off, b_tile), :] = h
                    return h
                lax.fori_loop(0, T, body, h, unroll=4)

            hs = hs_ref[...]                                         # (R, H)
            y = (jnp.dot(hs.astype(w_lin_ref.dtype), w_lin_ref[...],
                         preferred_element_type=jnp.float32)
                 + b_lin_ref[...])
            y_ref[...] = jnp.maximum(y, 0.0).astype(y_ref.dtype)     # (R, E)

        # Tied-embedding projection for the current V tile (runs every step).
        out_ref[...] = jnp.dot(y_ref[...], emb_wT_ref[...],
                               preferred_element_type=jnp.float32)   # (R, Vt)

    return kernel


def rnn_forward(tokens, emb_w, w_ih, w_hh, b_ih, b_hh, w_lin, b_lin,
                *, b_tile=None, v_tile=None, mm_dtype=None,
                rec_dtype=jnp.float32):
    B, T = tokens.shape
    V, E = emb_w.shape
    H = w_hh.shape[0]

    kind = _device_kind()
    if mm_dtype is None:
        # v5e has the least MXU / HBM throughput -> default big matmuls to bf16
        # there; keep exact f32 elsewhere.
        mm_dtype = jnp.bfloat16 if _is_v5e(kind) else jnp.float32
    mm_bytes = jnp.dtype(mm_dtype).itemsize
    rec_bytes = jnp.dtype(rec_dtype).itemsize

    # ---- generation-aware tile selection ---------------------------------
    mxu_m = 128 if "v5" in kind else 256            # MXU M rows (v5*: 128)
    cap = _vmem_cap_bytes()
    budget = cap - (12 << 20)                       # headroom for internal scratch

    if b_tile is None:
        b_tile = min(_round_up(B, 8), mxu_m)
    b_tile = max(8, (b_tile // 8) * 8)

    if v_tile is None:
        v_cap = max(128, _round_up(V, 128))
        v_tile = next(c for c in (2048, 1024, 512, 256, 128) if c <= v_cap)

    def est(bt, vt):
        R_ = T * bt
        return (2 * R_ * E * mm_bytes                       # x blocks (2 bufs)
                + 2 * R_ * vt * 4                           # out blocks
                + 2 * E * vt * mm_bytes                     # emb_wT tile
                + 2 * (E * H * mm_bytes + H * H * rec_bytes
                       + H * E * mm_bytes + 8 * (H + E) * 4)  # small weights
                + 2 * R_ * H * 4                            # xw + hs scratch
                + R_ * E * mm_bytes)                        # y scratch

    while est(b_tile, v_tile) > budget and v_tile > 128:
        v_tile //= 2
    while est(b_tile, v_tile) > budget and b_tile > 8:
        b_tile = max(8, ((b_tile // 2) // 8) * 8)

    Bp = _round_up(B, b_tile)
    Vp = _round_up(V, v_tile)
    nb = Bp // b_tile
    nv = Vp // v_tile
    R = T * b_tile                                  # rows per batch tile

    # ---- operand prep (glue) ---------------------------------------------
    emb_w_f32 = jnp.asarray(emb_w, jnp.float32)
    tok = jnp.pad(jnp.asarray(tokens, jnp.int32), ((0, Bp - B), (0, 0)))
    # Time-major rows inside each batch tile (row = (t, b)); transpose the tiny
    # token array, then gather straight into the final layout -> no big
    # activation transpose round trip.
    tok_rows = tok.reshape(nb, b_tile, T).transpose(0, 2, 1).reshape(nb, R)
    x_rows = jnp.take(emb_w_f32, tok_rows, axis=0).astype(mm_dtype)  # (nb, R, E)
    # TODO(synk): fuse the embedding gather into the kernel via scalar-prefetched
    # token ids + manual DMA so only tokens (not gathered activations) hit HBM.

    w_ih_t = jnp.asarray(w_ih, jnp.float32).T.astype(mm_dtype)       # (E, H)
    w_hh_t = jnp.asarray(w_hh, jnp.float32).T.astype(rec_dtype)      # (H, H)
    b_h = (jnp.asarray(b_ih, jnp.float32)
           + jnp.asarray(b_hh, jnp.float32)).reshape(1, H)
    w_lin_t = jnp.asarray(w_lin, jnp.float32).T.astype(mm_dtype)     # (H, E)
    b_lin_r = jnp.asarray(b_lin, jnp.float32).reshape(1, E)
    # Pad vocab to a multiple of the (128-lane) V tile -> lane-dense stores.
    emb_wT = jnp.pad(emb_w_f32.T, ((0, 0), (0, Vp - V))).astype(mm_dtype)

    vmem_limit = int(min(cap - (1 << 20),
                         max(est(b_tile, v_tile) + (8 << 20), 32 << 20)))

    kernel = _make_rnn_kernel(T, b_tile)
    out_rows = pl.pallas_call(
        kernel,
        out_shape=jax.ShapeDtypeStruct((nb, R, Vp), jnp.float32),
        grid_spec=pltpu.PrefetchScalarGridSpec(
            num_scalar_prefetch=0,
            grid=(nb, nv),                       # V is the inner, sequential axis
            in_specs=[
                pl.BlockSpec((None, R, E), lambda i, v: (i, 0, 0)),
                # NOTE: the weight blocks below have constant index_maps and are
                # DMA'd once; single-buffering them (pipeline_mode=pl.Buffered(1))
                # would halve their VMEM footprint once that path is available.
                pl.BlockSpec((E, H), lambda i, v: (0, 0)),
                pl.BlockSpec((H, H), lambda i, v: (0, 0)),
                pl.BlockSpec((1, H), lambda i, v: (0, 0)),
                pl.BlockSpec((H, E), lambda i, v: (0, 0)),
                pl.BlockSpec((1, E), lambda i, v: (0, 0)),
                pl.BlockSpec((E, v_tile), lambda i, v: (0, v)),
            ],
            out_specs=pl.BlockSpec((None, R, v_tile), lambda i, v: (i, 0, v)),
            scratch_shapes=[
                pltpu.VMEM((R, H), jnp.float32),     # xw
                pltpu.VMEM((R, H), jnp.float32),     # hidden states
                pltpu.VMEM((R, E), mm_dtype),        # Linear+ReLU output
            ],
        ),
        compiler_params=pltpu.CompilerParams(
            dimension_semantics=("parallel", "arbitrary"),
            vmem_limit_bytes=vmem_limit),
    )(x_rows, w_ih_t, w_hh_t, b_h, w_lin_t, b_lin_r, emb_wT)

    out = (out_rows.reshape(nb, T, b_tile, Vp)
           .transpose(0, 2, 1, 3)
           .reshape(Bp, T, Vp))
    return out[:B, :, :V]


def rnn_reference(tokens, emb_w, w_ih, w_hh, b_ih, b_hh, w_lin, b_lin):
    """Plain-JAX reference mirroring the PyTorch forward exactly (f32)."""
    x = emb_w[tokens]                                      # (B, T, E)
    mean = x.mean(-1, keepdims=True)
    var = ((x - mean) ** 2).mean(-1, keepdims=True)
    xn = (x - mean) / jnp.sqrt(var + LN_EPS)
    B = xn.shape[0]
    H = w_hh.shape[0]

    def step(h, xt):
        h = jnp.tanh(xt @ w_ih.T + b_ih + h @ w_hh.T + b_hh)
        return h, h

    _, hs = lax.scan(step, jnp.zeros((B, H), jnp.float32),
                     jnp.swapaxes(xn, 0, 1))
    hs = jnp.swapaxes(hs, 0, 1)                            # (B, T, H)
    y = jnp.maximum(hs @ w_lin.T + b_lin, 0.0)
    return y @ emb_w.T                                     # (B, T, V)


if __name__ == "__main__":
    # Small shapes consistent with the module:
    #   vocab_size=256, embedding_dim=input_size=128, hidden_size=128, B=2, T=8
    V, E, H = 256, 128, 128
    B, T = 2, 8

    key = jax.random.PRNGKey(0)
    k = jax.random.split(key, 8)
    tokens = jax.random.randint(k[0], (B, T), 0, V, dtype=jnp.int32)
    emb_w = jax.random.normal(k[1], (V, E), jnp.float32)              # like nn.Embedding
    s = 1.0 / jnp.sqrt(H)
    w_ih = jax.random.uniform(k[2], (H, E), jnp.float32, -s, s)       # nn.RNN weight_ih_l0
    w_hh = jax.random.uniform(k[3], (H, H), jnp.float32, -s, s)       # nn.RNN weight_hh_l0
    b_ih = jax.random.uniform(k[4], (H,), jnp.float32, -s, s)
    b_hh = jax.random.uniform(k[5], (H,), jnp.float32, -s, s)
    w_lin = jax.random.uniform(k[6], (E, H), jnp.float32, -s, s)      # nn.Linear(H, E)
    b_lin = jax.random.uniform(k[7], (E,), jnp.float32, -s, s)

    ref = rnn_reference(tokens, emb_w, w_ih, w_hh, b_ih, b_hh, w_lin, b_lin)

    # f32 path: matches PyTorch-f32 numerics.
    out = rnn_forward(tokens, emb_w, w_ih, w_hh, b_ih, b_hh, w_lin, b_lin,
                      mm_dtype=jnp.float32)
    out = jax.block_until_ready(out)
    assert out.shape == (B, T, V)
    assert jnp.allclose(out, ref, atol=1e-3, rtol=1e-3), "f32 kernel mismatch"

    # Explicitly exercise the V-tiled grid axis (nv=2) and multiple batch tiles
    # (nb=2) with batch padding.
    B2 = 10
    tokens2 = jax.random.randint(k[0], (B2, T), 0, V, dtype=jnp.int32)
    ref2 = rnn_reference(tokens2, emb_w, w_ih, w_hh, b_ih, b_hh, w_lin, b_lin)
    out2 = rnn_forward(tokens2, emb_w, w_ih, w_hh, b_ih, b_hh, w_lin, b_lin,
                       b_tile=8, v_tile=128, mm_dtype=jnp.float32)
    out2 = jax.block_until_ready(out2)
    assert out2.shape == (B2, T, V)
    assert jnp.allclose(out2, ref2, atol=1e-3, rtol=1e-3), "V-tiled kernel mismatch"

    # Throughput mode: bf16 MXU inputs (f32 accumulation) for the big matmuls
    # AND the recurrence (v6e/v7x-friendly). Tolerance sized for bf16 rounding.
    out_bf16 = rnn_forward(tokens, emb_w, w_ih, w_hh, b_ih, b_hh, w_lin, b_lin,
                           mm_dtype=jnp.bfloat16, rec_dtype=jnp.bfloat16)
    out_bf16 = jax.block_until_ready(out_bf16)
    assert jnp.allclose(out_bf16, ref, atol=5e-1, rtol=5e-2), "bf16 kernel drift"

    print("KERNEL_OK")
</pallas_src>

<mosaic_0001>
module attributes {stable_mosaic.version = 11 : i64} {
  func.func @kernel(%arg0: i32, %arg1: i32, %arg2: memref<1x64x128xf32, #tpu.memory_space<vmem>>, %arg3: memref<128x128xf32, #tpu.memory_space<vmem>>, %arg4: memref<128x128xf32, #tpu.memory_space<vmem>>, %arg5: memref<1x128xf32, #tpu.memory_space<vmem>>, %arg6: memref<128x128xf32, #tpu.memory_space<vmem>>, %arg7: memref<1x128xf32, #tpu.memory_space<vmem>>, %arg8: memref<128x256xf32, #tpu.memory_space<vmem>>, %arg9: memref<1x64x256xf32, #tpu.memory_space<vmem>>, %arg10: memref<64x128xf32, #tpu.memory_space<vmem>>, %arg11: memref<64x128xf32, #tpu.memory_space<vmem>>, %arg12: memref<64x128xf32, #tpu.memory_space<vmem>>) attributes {dimension_semantics = [#tpu.dimension_semantics<parallel>, #tpu.dimension_semantics<arbitrary>], iteration_bounds = array<i64: 1, 1>, scalar_prefetch = 0 : i64, scratch_operands = 3 : i64, tpu.core_type = #tpu.core_type<tc>, window_params = [{transform_indices = @transform_0, window_bounds = array<i64: 1, 64, 128>}, {pipeline_mode = #tpu.pipeline_mode<synchronous>, transform_indices = @transform_1, window_bounds = array<i64: 128, 128>}, {pipeline_mode = #tpu.pipeline_mode<synchronous>, transform_indices = @transform_2, window_bounds = array<i64: 128, 128>}, {pipeline_mode = #tpu.pipeline_mode<synchronous>, transform_indices = @transform_3, window_bounds = array<i64: 1, 128>}, {pipeline_mode = #tpu.pipeline_mode<synchronous>, transform_indices = @transform_4, window_bounds = array<i64: 128, 128>}, {pipeline_mode = #tpu.pipeline_mode<synchronous>, transform_indices = @transform_5, window_bounds = array<i64: 1, 128>}, {transform_indices = @transform_6, window_bounds = array<i64: 128, 256>}, {transform_indices = @transform_7, window_bounds = array<i64: 1, 64, 256>}]} {
    %c0_i32 = arith.constant 0 : i32
    %0 = arith.cmpi eq, %arg1, %c0_i32 : i32
    %1 = arith.extui %0 : i1 to i32
    %c0_i32_0 = arith.constant 0 : i32
    %2 = arith.cmpi ne, %1, %c0_i32_0 : i32
    scf.if %2 {
      %c0_7 = arith.constant 0 : index
      %c0_8 = arith.constant 0 : index
      %c0_9 = arith.constant 0 : index
      %9 = vector.load %arg2[%c0_7, %c0_8, %c0_9] : memref<1x64x128xf32, #tpu.memory_space<vmem>>, vector<1x64x128xf32>
      %10 = vector.shape_cast %9 : vector<1x64x128xf32> to vector<64x128xf32>
      %cst_10 = arith.constant dense<0.000000e+00> : vector<64xf32>
      %11 = vector.multi_reduction <add>, %10, %cst_10 [1] : vector<64x128xf32> to vector<64xf32>
      %12 = vector.shape_cast %11 : vector<64xf32> to vector<64x1xf32>
      %cst_11 = arith.constant 1.280000e+02 : f32
      %13 = vector.broadcast %cst_11 : f32 to vector<64x1xf32>
      %14 = arith.divf %12, %13 : vector<64x1xf32>
      %15 = vector.broadcast %14 : vector<64x1xf32> to vector<64x128xf32>
      %16 = arith.subf %10, %15 : vector<64x128xf32>
      %17 = arith.mulf %16, %16 : vector<64x128xf32>
      %cst_12 = arith.constant dense<0.000000e+00> : vector<64xf32>
      %18 = vector.multi_reduction <add>, %17, %cst_12 [1] : vector<64x128xf32> to vector<64xf32>
      %19 = vector.shape_cast %18 : vector<64xf32> to vector<64x1xf32>
      %cst_13 = arith.constant 1.280000e+02 : f32
      %20 = vector.broadcast %cst_13 : f32 to vector<64x1xf32>
      %21 = arith.divf %19, %20 : vector<64x1xf32>
      %cst_14 = arith.constant 9.99999974E-6 : f32
      %22 = vector.broadcast %cst_14 : f32 to vector<64x1xf32>
      %23 = arith.addf %21, %22 : vector<64x1xf32>
      %24 = math.rsqrt %23 : vector<64x1xf32>
      %25 = vector.broadcast %24 : vector<64x1xf32> to vector<64x128xf32>
      %26 = arith.mulf %16, %25 : vector<64x128xf32>
      %c0_15 = arith.constant 0 : index
      %c0_16 = arith.constant 0 : index
      %27 = vector.load %arg3[%c0_15, %c0_16] : memref<128x128xf32, #tpu.memory_space<vmem>>, vector<128x128xf32>
      %cst_17 = arith.constant dense<0.000000e+00> : vector<64x128xf32>
      %28 = tpu.matmul %26, %27, %cst_17 {dimension_numbers = #tpu.dot_dimension_numbers<[1], [0], [0], [1], [0, 0, 1, 1], [], []>} : vector<64x128xf32>, vector<128x128xf32>, vector<64x128xf32> -> vector<64x128xf32>
      %c0_18 = arith.constant 0 : index
      %c0_19 = arith.constant 0 : index
      %29 = vector.load %arg5[%c0_18, %c0_19] : memref<1x128xf32, #tpu.memory_space<vmem>>, vector<1x128xf32>
      %30 = vector.broadcast %29 : vector<1x128xf32> to vector<64x128xf32>
      %31 = arith.addf %28, %30 : vector<64x128xf32>
      %c0_20 = arith.constant 0 : index
      %c0_21 = arith.constant 0 : index
      %32 = vector.load %arg10[%c0_20, %c0_21] : memref<64x128xf32, #tpu.memory_space<vmem>>, vector<64x128xf32>
      tpu.vector_store %arg10[%c0_20, %c0_21], %31 {strides = array<i32>} : memref<64x128xf32, #tpu.memory_space<vmem>>, vector<64x128xf32>,
      %c0_22 = arith.constant 0 : index
      %c0_23 = arith.constant 0 : index
      %33 = vector.load %arg4[%c0_22, %c0_23] : memref<128x128xf32, #tpu.memory_space<vmem>>, vector<128x128xf32>
      %cst_24 = arith.constant 0.000000e+00 : f32
      %34 = vector.broadcast %cst_24 : f32 to vector<8x128xf32>
      %c0_25 = arith.constant 0 : index
      %c0_26 = arith.constant 0 : index
      %35 = vector.load %arg10[%c0_25, %c0_26] : memref<64x128xf32, #tpu.memory_space<vmem>>, vector<8x128xf32>
      %cst_27 = arith.constant dense<0.000000e+00> : vector<8x128xf32>
      %36 = tpu.matmul %34, %33, %cst_27 {dimension_numbers = #tpu.dot_dimension_numbers<[1], [0], [0], [1], [0, 0, 1, 1], [], []>} : vector<8x128xf32>, vector<128x128xf32>, vector<8x128xf32> -> vector<8x128xf32>
      %37 = arith.addf %35, %36 : vector<8x128xf32>
      %38 = math.tanh %37 : vector<8x128xf32>
      %c0_28 = arith.constant 0 : index
      %c0_29 = arith.constant 0 : index
      %39 = vector.load %arg11[%c0_28, %c0_29] : memref<64x128xf32, #tpu.memory_space<vmem>>, vector<8x128xf32>
      tpu.vector_store %arg11[%c0_28, %c0_29], %38 {strides = array<i32>} : memref<64x128xf32, #tpu.memory_space<vmem>>, vector<8x128xf32>,
      %c8 = arith.constant 8 : index
      %c0_30 = arith.constant 0 : index
      %40 = vector.load %arg10[%c8, %c0_30] : memref<64x128xf32, #tpu.memory_space<vmem>>, vector<8x128xf32>
      %cst_31 = arith.constant dense<0.000000e+00> : vector<8x128xf32>
      %41 = tpu.matmul %38, %33, %cst_31 {dimension_numbers = #tpu.dot_dimension_numbers<[1], [0], [0], [1], [0, 0, 1, 1], [], []>} : vector<8x128xf32>, vector<128x128xf32>, vector<8x128xf32> -> vector<8x128xf32>
      %42 = arith.addf %40, %41 : vector<8x128xf32>
      %43 = math.tanh %42 : vector<8x128xf32>
      %c8_32 = arith.constant 8 : index
      %c0_33 = arith.constant 0 : index
      %44 = vector.load %arg11[%c8_32, %c0_33] : memref<64x128xf32, #tpu.memory_space<vmem>>, vector<8x128xf32>
      tpu.vector_store %arg11[%c8_32, %c0_33], %43 {strides = array<i32>} : memref<64x128xf32, #tpu.memory_space<vmem>>, vector<8x128xf32>,
      %c16 = arith.constant 16 : index
      %c0_34 = arith.constant 0 : index
      %45 = vector.load %arg10[%c16, %c0_34] : memref<64x128xf32, #tpu.memory_space<vmem>>, vector<8x128xf32>
      %cst_35 = arith.constant dense<0.000000e+00> : vector<8x128xf32>
      %46 = tpu.matmul %43, %33, %cst_35 {dimension_numbers = #tpu.dot_dimension_numbers<[1], [0], [0], [1], [0, 0, 1, 1], [], []>} : vector<8x128xf32>, vector<128x128xf32>, vector<8x128xf32> -> vector<8x128xf32>
      %47 = arith.addf %45, %46 : vector<8x128xf32>
      %48 = math.tanh %47 : vector<8x128xf32>
      %c16_36 = arith.constant 16 : index
      %c0_37 = arith.constant 0 : index
      %49 = vector.load %arg11[%c16_36, %c0_37] : memref<64x128xf32, #tpu.memory_space<vmem>>, vector<8x128xf32>
      tpu.vector_store %arg11[%c16_36, %c0_37], %48 {strides = array<i32>} : memref<64x128xf32, #tpu.memory_space<vmem>>, vector<8x128xf32>,
      %c24 = arith.constant 24 : index
      %c0_38 = arith.constant 0 : index
      %50 = vector.load %arg10[%c24, %c0_38] : memref<64x128xf32, #tpu.memory_space<vmem>>, vector<8x128xf32>
      %cst_39 = arith.constant dense<0.000000e+00> : vector<8x128xf32>
      %51 = tpu.matmul %48, %33, %cst_39 {dimension_numbers = #tpu.dot_dimension_numbers<[1], [0], [0], [1], [0, 0, 1, 1], [], []>} : vector<8x128xf32>, vector<128x128xf32>, vector<8x128xf32> -> vector<8x128xf32>
      %52 = arith.addf %50, %51 : vector<8x128xf32>
      %53 = math.tanh %52 : vector<8x128xf32>
      %c24_40 = arith.constant 24 : index
      %c0_41 = arith.constant 0 : index
      %54 = vector.load %arg11[%c24_40, %c0_41] : memref<64x128xf32, #tpu.memory_space<vmem>>, vector<8x128xf32>
      tpu.vector_store %arg11[%c24_40, %c0_41], %53 {strides = array<i32>} : memref<64x128xf32, #tpu.memory_space<vmem>>, vector<8x128xf32>,
      %c32 = arith.constant 32 : index
      %c0_42 = arith.constant 0 : index
      %55 = vector.load %arg10[%c32, %c0_42] : memref<64x128xf32, #tpu.memory_space<vmem>>, vector<8x128xf32>
      %cst_43 = arith.constant dense<0.000000e+00> : vector<8x128xf32>
      %56 = tpu.matmul %53, %33, %cst_43 {dimension_numbers = #tpu.dot_dimension_numbers<[1], [0], [0], [1], [0, 0, 1, 1], [], []>} : vector<8x128xf32>, vector<128x128xf32>, vector<8x128xf32> -> vector<8x128xf32>
      %57 = arith.addf %55, %56 : vector<8x128xf32>
      %58 = math.tanh %57 : vector<8x128xf32>
      %c32_44 = arith.constant 32 : index
      %c0_45 = arith.constant 0 : index
      %59 = vector.load %arg11[%c32_44, %c0_45] : memref<64x128xf32, #tpu.memory_space<vmem>>, vector<8x128xf32>
      tpu.vector_store %arg11[%c32_44, %c0_45], %58 {strides = array<i32>} : memref<64x128xf32, #tpu.memory_space<vmem>>, vector<8x128xf32>,
      %c40 = arith.constant 40 : index
      %c0_46 = arith.constant 0 : index
      %60 = vector.load %arg10[%c40, %c0_46] : memref<64x128xf32, #tpu.memory_space<vmem>>, vector<8x128xf32>
      %cst_47 = arith.constant dense<0.000000e+00> : vector<8x128xf32>
      %61 = tpu.matmul %58, %33, %cst_47 {dimension_numbers = #tpu.dot_dimension_numbers<[1], [0], [0], [1], [0, 0, 1, 1], [], []>} : vector<8x128xf32>, vector<128x128xf32>, vector<8x128xf32> -> vector<8x128xf32>
      %62 = arith.addf %60, %61 : vector<8x128xf32>
      %63 = math.tanh %62 : vector<8x128xf32>
      %c40_48 = arith.constant 40 : index
      %c0_49 = arith.constant 0 : index
      %64 = vector.load %arg11[%c40_48, %c0_49] : memref<64x128xf32, #tpu.memory_space<vmem>>, vector<8x128xf32>
      tpu.vector_store %arg11[%c40_48, %c0_49], %63 {strides = array<i32>} : memref<64x128xf32, #tpu.memory_space<vmem>>, vector<8x128xf32>,
      %c48 = arith.constant 48 : index
      %c0_50 = arith.constant 0 : index
      %65 = vector.load %arg10[%c48, %c0_50] : memref<64x128xf32, #tpu.memory_space<vmem>>, vector<8x128xf32>
      %cst_51 = arith.constant dense<0.000000e+00> : vector<8x128xf32>
      %66 = tpu.matmul %63, %33, %cst_51 {dimension_numbers = #tpu.dot_dimension_numbers<[1], [0], [0], [1], [0, 0, 1, 1], [], []>} : vector<8x128xf32>, vector<128x128xf32>, vector<8x128xf32> -> vector<8x128xf32>
      %67 = arith.addf %65, %66 : vector<8x128xf32>
      %68 = math.tanh %67 : vector<8x128xf32>
      %c48_52 = arith.constant 48 : index
      %c0_53 = arith.constant 0 : index
      %69 = vector.load %arg11[%c48_52, %c0_53] : memref<64x128xf32, #tpu.memory_space<vmem>>, vector<8x128xf32>
      tpu.vector_store %arg11[%c48_52, %c0_53], %68 {strides = array<i32>} : memref<64x128xf32, #tpu.memory_space<vmem>>, vector<8x128xf32>,
      %c56 = arith.constant 56 : index
      %c0_54 = arith.constant 0 : index
      %70 = vector.load %arg10[%c56, %c0_54] : memref<64x128xf32, #tpu.memory_space<vmem>>, vector<8x128xf32>
      %cst_55 = arith.constant dense<0.000000e+00> : vector<8x128xf32>
      %71 = tpu.matmul %68, %33, %cst_55 {dimension_numbers = #tpu.dot_dimension_numbers<[1], [0], [0], [1], [0, 0, 1, 1], [], []>} : vector<8x128xf32>, vector<128x128xf32>, vector<8x128xf32> -> vector<8x128xf32>
      %72 = arith.addf %70, %71 : vector<8x128xf32>
      %73 = math.tanh %72 : vector<8x128xf32>
      %c56_56 = arith.constant 56 : index
      %c0_57 = arith.constant 0 : index
      %74 = vector.load %arg11[%c56_56, %c0_57] : memref<64x128xf32, #tpu.memory_space<vmem>>, vector<8x128xf32>
      tpu.vector_store %arg11[%c56_56, %c0_57], %73 {strides = array<i32>} : memref<64x128xf32, #tpu.memory_space<vmem>>, vector<8x128xf32>,
      %c0_58 = arith.constant 0 : index
      %c0_59 = arith.constant 0 : index
      %75 = vector.load %arg11[%c0_58, %c0_59] : memref<64x128xf32, #tpu.memory_space<vmem>>, vector<64x128xf32>
      %c0_60 = arith.constant 0 : index
      %c0_61 = arith.constant 0 : index
      %76 = vector.load %arg6[%c0_60, %c0_61] : memref<128x128xf32, #tpu.memory_space<vmem>>, vector<128x128xf32>
      %cst_62 = arith.constant dense<0.000000e+00> : vector<64x128xf32>
      %77 = tpu.matmul %75, %76, %cst_62 {dimension_numbers = #tpu.dot_dimension_numbers<[1], [0], [0], [1], [0, 0, 1, 1], [], []>} : vector<64x128xf32>, vector<128x128xf32>, vector<64x128xf32> -> vector<64x128xf32>
      %c0_63 = arith.constant 0 : index
      %c0_64 = arith.constant 0 : index
      %78 = vector.load %arg7[%c0_63, %c0_64] : memref<1x128xf32, #tpu.memory_space<vmem>>, vector<1x128xf32>
      %79 = vector.broadcast %78 : vector<1x128xf32> to vector<64x128xf32>
      %80 = arith.addf %77, %79 : vector<64x128xf32>
      %cst_65 = arith.constant 0.000000e+00 : f32
      %81 = vector.broadcast %cst_65 : f32 to vector<64x128xf32>
      %82 = arith.maximumf %80, %81 : vector<64x128xf32>
      %c0_66 = arith.constant 0 : index
      %c0_67 = arith.constant 0 : index
      %83 = vector.load %arg12[%c0_66, %c0_67] : memref<64x128xf32, #tpu.memory_space<vmem>>, vector<64x128xf32>
      tpu.vector_store %arg12[%c0_66, %c0_67], %82 {strides = array<i32>} : memref<64x128xf32, #tpu.memory_space<vmem>>, vector<64x128xf32>,
    } else {
    }
    %c0 = arith.constant 0 : index
    %c0_1 = arith.constant 0 : index
    %3 = vector.load %arg12[%c0, %c0_1] : memref<64x128xf32, #tpu.memory_space<vmem>>, vector<64x128xf32>
    %c0_2 = arith.constant 0 : index
    %c0_3 = arith.constant 0 : index
    %4 = vector.load %arg8[%c0_2, %c0_3] : memref<128x256xf32, #tpu.memory_space<vmem>>, vector<128x256xf32>
    %cst = arith.constant dense<0.000000e+00> : vector<64x256xf32>
    %5 = tpu.matmul %3, %4, %cst {dimension_numbers = #tpu.dot_dimension_numbers<[1], [0], [0], [1], [0, 0, 1, 1], [], []>} : vector<64x128xf32>, vector<128x256xf32>, vector<64x256xf32> -> vector<64x256xf32>
    %c0_4 = arith.constant 0 : index
    %c0_5 = arith.constant 0 : index
    %c0_6 = arith.constant 0 : index
    %6 = vector.load %arg9[%c0_4, %c0_5, %c0_6] : memref<1x64x256xf32, #tpu.memory_space<vmem>>, vector<1x64x256xf32>
    %7 = vector.shape_cast %6 : vector<1x64x256xf32> to vector<64x256xf32>
    %8 = vector.shape_cast %5 : vector<64x256xf32> to vector<1x64x256xf32>
    tpu.vector_store %arg9[%c0_4, %c0_5, %c0_6], %8 {strides = array<i32>} : memref<1x64x256xf32, #tpu.memory_space<vmem>>, vector<1x64x256xf32>,
    return
  }
  func.func @transform_0(%arg0: i32, %arg1: i32) -> (i32, i32, i32) {
    %c0_i32 = arith.constant 0 : i32
    %c0_i32_0 = arith.constant 0 : i32
    %c0_i32_1 = arith.constant 0 : i32
    return %arg0, %c0_i32, %c0_i32_0 : i32, i32, i32
  }
  func.func @transform_1(%arg0: i32, %arg1: i32) -> (i32, i32) {
    %c0_i32 = arith.constant 0 : i32
    %c0_i32_0 = arith.constant 0 : i32
    %c0_i32_1 = arith.constant 0 : i32
    return %c0_i32, %c0_i32_0 : i32, i32
  }
  func.func @transform_2(%arg0: i32, %arg1: i32) -> (i32, i32) {
    %c0_i32 = arith.constant 0 : i32
    %c0_i32_0 = arith.constant 0 : i32
    %c0_i32_1 = arith.constant 0 : i32
    return %c0_i32, %c0_i32_0 : i32, i32
  }
  func.func @transform_3(%arg0: i32, %arg1: i32) -> (i32, i32) {
    %c0_i32 = arith.constant 0 : i32
    %c0_i32_0 = arith.constant 0 : i32
    %c0_i32_1 = arith.constant 0 : i32
    return %c0_i32, %c0_i32_0 : i32, i32
  }
  func.func @transform_4(%arg0: i32, %arg1: i32) -> (i32, i32) {
    %c0_i32 = arith.constant 0 : i32
    %c0_i32_0 = arith.constant 0 : i32
    %c0_i32_1 = arith.constant 0 : i32
    return %c0_i32, %c0_i32_0 : i32, i32
  }
  func.func @transform_5(%arg0: i32, %arg1: i32) -> (i32, i32) {
    %c0_i32 = arith.constant 0 : i32
    %c0_i32_0 = arith.constant 0 : i32
    %c0_i32_1 = arith.constant 0 : i32
    return %c0_i32, %c0_i32_0 : i32, i32
  }
  func.func @transform_6(%arg0: i32, %arg1: i32) -> (i32, i32) {
    %c0_i32 = arith.constant 0 : i32
    %c0_i32_0 = arith.constant 0 : i32
    return %c0_i32, %arg1 : i32, i32
  }
  func.func @transform_7(%arg0: i32, %arg1: i32) -> (i32, i32, i32) {
    %c0_i32 = arith.constant 0 : i32
    %c0_i32_0 = arith.constant 0 : i32
    return %arg0, %c0_i32, %arg1 : i32, i32, i32
  }
}

</mosaic_0001>

<llo_original>
// kernel: tpu_custom_call.1
$region0: #{tpu_custom_call.1}
  #allocation0 [shape = 'u32[]', space=smem, size = 0x4, offset = 0x4, fixed_abs, tag = 'smem constant byte address 0x4 - core index']
  #allocation1 [shape = 'u32[144,128]{1,0:T(1,128)}', space=vmem, size = 0x12000, scoped, tag = 'internal scratch']
  #allocation2 [shape = 'f32[64,128]{1,0:T(8,128)}', space=vmem, size = 0x8000, scoped, tag = 'scratch operand']
  #allocation3 [shape = 'f32[64,128]{1,0:T(8,128)}', space=vmem, size = 0x8000, scoped, tag = 'scratch operand']
  #allocation4 [shape = 'f32[64,128]{1,0:T(8,128)}', space=vmem, size = 0x8000, scoped, tag = 'scratch operand']
  %s0 = inlined_call_operand.hbm [shape: f32[1,64,128], index: 0, kind: input, shape index: {}]
  %s1 = inlined_call_operand.hbm [shape: f32[128,128], index: 1, kind: input, shape index: {}]
  %s2 = inlined_call_operand.hbm [shape: f32[128,128], index: 2, kind: input, shape index: {}]
  %s3 = inlined_call_operand.vmem [shape: f32[1,128], index: 3, kind: input, shape index: {}]
  %s4 = inlined_call_operand.hbm [shape: f32[128,128], index: 4, kind: input, shape index: {}]
  %s5 = inlined_call_operand.vmem [shape: f32[1,128], index: 5, kind: input, shape index: {}]
  %s6 = inlined_call_operand.hbm [shape: f32[128,256], index: 6, kind: input, shape index: {}]
  %s7 = inlined_call_operand.hbm [shape: f32[1,64,256], index: 7, kind: output, shape index: {}]
  %s8 = sld [smem:[#allocation0]]
  $region62: #{tpu_custom_call.1} parent=0
    _
  %s10 = ssub.s32 1, %s8
  %s11 = scalar_select 0, %s10, %s8
  $region1: #{tpu_custom_call.1} parent=0
    #allocation5 [shape = 'u8[32768]{0}', space=vmem, size = 0x8000, scoped, tag = 'input window, operand 0, single buffered']
    #allocation6 [shape = 's32[1]{0}', space=sflag, size = 0x4, scoped, tag = 'scoped memory for tpu_custom_call.1']
    #allocation7 [shape = 's32[1]{0}', space=sflag, size = 0x4, scoped, tag = 'scoped memory for tpu_custom_call.1']
    #allocation8 [shape = 'u8[65536]{0}', space=vmem, size = 0x10000, scoped, tag = 'input window, operand 1, single buffered']
    #allocation9 [shape = 's32[1]{0}', space=sflag, size = 0x4, scoped, tag = 'scoped memory for tpu_custom_call.1']
    #allocation10 [shape = 'u8[65536]{0}', space=vmem, size = 0x10000, scoped, tag = 'input window, operand 2, single buffered']
    #allocation11 [shape = 'u8[65536]{0}', space=vmem, size = 0x10000, scoped, tag = 'input window, operand 4, single buffered']
    #allocation12 [shape = 's32[1]{0}', space=sflag, size = 0x4, scoped, tag = 'scoped memory for tpu_custom_call.1']
    #allocation13 [shape = 'u8[131072]{0}', space=vmem, size = 0x20000, scoped, tag = 'input window, operand 6, single buffered']
    #allocation14 [shape = 'u8[65536]{0}', space=vmem, size = 0x10000, scoped, tag = 'output window, operand 0, single buffered']
    %12 = vsyncpa [#allocation6], 0
    %13 = vsyncpa [#allocation9], 0
    %14 = vsyncpa [#allocation12], 0
    %15 = vsyncpa [#allocation7], 0
    // Predicated region
    $region2: #{tpu_custom_call.1} parent=1 // pred_check
      _
    $region3: #{tpu_custom_call.1} parent=1 // pred_check_branch
      %17 = sbr.rel (0) target = $region5
    $region4: #{tpu_custom_call.1} parent=1 // pred_region
      %s19 = ssub.s32 1024, 1024
      %20 = vsyncadd [#allocation6], %s19
      %s21 = sshll.u32 [#allocation5], 4
      %s22 = int_to_ptr.vmem [resolvable:$true] %s21
      %27 = dma.hbm_to_vmem [thread:$0]  %s0, 1024, %s22, [#allocation6], 128, 128, 8
    $region5: #{tpu_custom_call.1} parent=1 // pred_fallthru
      _
    // Predicated region
    $region6: #{tpu_custom_call.1} parent=1 // pred_check
      _
    $region7: #{tpu_custom_call.1} parent=1 // pred_check_branch
      %29 = sbr.rel (0) target = $region9
    $region8: #{tpu_custom_call.1} parent=1 // pred_region
      %s31 = ssub.s32 2048, 2048
      %32 = vsyncadd [#allocation9], %s31
      %s33 = sshll.u32 [#allocation8], 4
      %s34 = int_to_ptr.vmem [resolvable:$true] %s33
      %39 = dma.hbm_to_vmem [thread:$0]  %s1, 2048, %s34, [#allocation9], 128, 128, 8
    $region9: #{tpu_custom_call.1} parent=1 // pred_fallthru
      _
    // Predicated region
    $region10: #{tpu_custom_call.1} parent=1 // pred_check
      _
    $region11: #{tpu_custom_call.1} parent=1 // pred_check_branch
      %41 = sbr.rel (0) target = $region13
    $region12: #{tpu_custom_call.1} parent=1 // pred_region
      %s43 = ssub.s32 2048, 2048
      %44 = vsyncadd [#allocation9], %s43
      %s45 = sshll.u32 [#allocation10], 4
      %s46 = int_to_ptr.vmem [resolvable:$true] %s45
      %51 = dma.hbm_to_vmem [thread:$0]  %s2, 2048, %s46, [#allocation9], 128, 128, 8
    $region13: #{tpu_custom_call.1} parent=1 // pred_fallthru
      _
    // Predicated region
    $region14: #{tpu_custom_call.1} parent=1 // pred_check
      _
    $region15: #{tpu_custom_call.1} parent=1 // pred_check_branch
      %53 = sbr.rel (0) target = $region17
    $region16: #{tpu_custom_call.1} parent=1 // pred_region
      _
    $region17: #{tpu_custom_call.1} parent=1 // pred_fallthru
      _
    // Predicated region
    $region18: #{tpu_custom_call.1} parent=1 // pred_check
      _
    $region19: #{tpu_custom_call.1} parent=1 // pred_check_branch
      %55 = sbr.rel (0) target = $region21
    $region20: #{tpu_custom_call.1} parent=1 // pred_region
      %s57 = ssub.s32 2048, 2048
      %58 = vsyncadd [#allocation12], %s57
      %s59 = sshll.u32 [#allocation11], 4
      %s60 = int_to_ptr.vmem [resolvable:$true] %s59
      %65 = dma.hbm_to_vmem [thread:$0]  %s4, 2048, %s60, [#allocation12], 128, 128, 8
    $region21: #{tpu_custom_call.1} parent=1 // pred_fallthru
      _
    // Predicated region
    $region22: #{tpu_custom_call.1} parent=1 // pred_check
      _
    $region23: #{tpu_custom_call.1} parent=1 // pred_check_branch
      %67 = sbr.rel (0) target = $region25
    $region24: #{tpu_custom_call.1} parent=1 // pred_region
      _
    $region25: #{tpu_custom_call.1} parent=1 // pred_fallthru
      _
    // Predicated region
    $region26: #{tpu_custom_call.1} parent=1 // pred_check
      _
    $region27: #{tpu_custom_call.1} parent=1 // pred_check_branch
      %69 = sbr.rel (0) target = $region29
    $region28: #{tpu_custom_call.1} parent=1 // pred_region
      %s71 = ssub.s32 4096, 4096
      %72 = vsyncadd [#allocation12], %s71
      %s73 = sshll.u32 [#allocation13], 4
      %s74 = int_to_ptr.vmem [resolvable:$true] %s73
      %79 = dma.hbm_to_vmem [thread:$0]  %s6, 4096, %s74, [#allocation12], 256, 256, 16
    $region29: #{tpu_custom_call.1} parent=1 // pred_fallthru
      _
    // Predicated region
    $region30: #{tpu_custom_call.1} parent=1 // pred_check
      _
    $region31: #{tpu_custom_call.1} parent=1 // pred_check_branch
      %81 = sbr.rel (0) target = $region33
    $region32: #{tpu_custom_call.1} parent=1 // pred_region
      %82 = dma.done [#allocation6], 1024
    $region33: #{tpu_custom_call.1} parent=1 // pred_fallthru
      _
    // Predicated region
    $region34: #{tpu_custom_call.1} parent=1 // pred_check
      _
    $region35: #{tpu_custom_call.1} parent=1 // pred_check_branch
      %84 = sbr.rel (0) target = $region37
    $region36: #{tpu_custom_call.1} parent=1 // pred_region
      %85 = dma.done [#allocation9], 2048
    $region37: #{tpu_custom_call.1} parent=1 // pred_fallthru
      _
    // Predicated region
    $region38: #{tpu_custom_call.1} parent=1 // pred_check
      _
    $region39: #{tpu_custom_call.1} parent=1 // pred_check_branch
      %87 = sbr.rel (0) target = $region41
    $region40: #{tpu_custom_call.1} parent=1 // pred_region
      %88 = dma.done [#allocation9], 2048
    $region41: #{tpu_custom_call.1} parent=1 // pred_fallthru
      _
    // Predicated region
    $region42: #{tpu_custom_call.1} parent=1 // pred_check
      _
    $region43: #{tpu_custom_call.1} parent=1 // pred_check_branch
      %90 = sbr.rel (0) target = $region45
    $region44: #{tpu_custom_call.1} parent=1 // pred_region
      %91 = dma.done [#allocation12], 2048
    $region45: #{tpu_custom_call.1} parent=1 // pred_fallthru
      _
    // Predicated region
    $region46: #{tpu_custom_call.1} parent=1 // pred_check
      _
    $region47: #{tpu_custom_call.1} parent=1 // pred_check_branch
      %93 = sbr.rel (0) target = $region49
    $region48: #{tpu_custom_call.1} parent=1 // pred_region
      %94 = dma.done [#allocation12], 4096
    $region49: #{tpu_custom_call.1} parent=1 // pred_fallthru
      _
    %p95 = scmp.eq.s32.totalorder 0, 0
    // Predicated region
    $region50: #{tpu_custom_call.1} parent=1 // pred_check
      %p96 = pneg %p95
    $region51: #{tpu_custom_call.1} parent=1 // pred_check_branch
      %98 = sbr.rel (%p96) target = $region53
    $region52: #{tpu_custom_call.1} parent=1 // pred_region
      %v99 = vld [vmem:[#allocation5] sm:$0xff]
      %v100 = vld [vmem:[#allocation5 + $0x8] sm:$0xff]
      %v101 = vld [vmem:[#allocation5 + $0x10] sm:$0xff]
      %v102 = vld [vmem:[#allocation5 + $0x18] sm:$0xff]
      %v103 = vld [vmem:[#allocation5 + $0x20] sm:$0xff]
      %v104 = vld [vmem:[#allocation5 + $0x28] sm:$0xff]
      %v105 = vld [vmem:[#allocation5 + $0x30] sm:$0xff]
      %v106 = vld [vmem:[#allocation5 + $0x38] sm:$0xff]
      %107 = vadd.xlane.f32.xlu0 %v99
      %v108 = vpop.xlane.xlu0 %107
      %109 = vadd.xlane.f32.xlu0 %v100
      %v110 = vpop.xlane.xlu0 %109
      %111 = vadd.xlane.f32.xlu0 %v101
      %v112 = vpop.xlane.xlu0 %111
      %113 = vadd.xlane.f32.xlu0 %v102
      %v114 = vpop.xlane.xlu0 %113
      %115 = vadd.xlane.f32.xlu0 %v103
      %v116 = vpop.xlane.xlu0 %115
      %117 = vadd.xlane.f32.xlu0 %v104
      %v118 = vpop.xlane.xlu0 %117
      %119 = vadd.xlane.f32.xlu0 %v105
      %v120 = vpop.xlane.xlu0 %119
      %121 = vadd.xlane.f32.xlu0 %v106
      %v122 = vpop.xlane.xlu0 %121
      %v123 = vrcp.pop 128.0
      %v124 = vmul.f32 %v108, %v123
      %v125 = vmul.f32 %v110, %v123
      %v126 = vmul.f32 %v112, %v123
      %v127 = vmul.f32 %v114, %v123
      %v128 = vmul.f32 %v116, %v123
      %v129 = vmul.f32 %v118, %v123
      %v130 = vmul.f32 %v120, %v123
      %v131 = vmul.f32 %v122, %v123
      %v132 = vsub.f32 %v99, %v124
      %v133 = vsub.f32 %v100, %v125
      %v134 = vsub.f32 %v101, %v126
      %v135 = vsub.f32 %v102, %v127
      %v136 = vsub.f32 %v103, %v128
      %v137 = vsub.f32 %v104, %v129
      %v138 = vsub.f32 %v105, %v130
      %v139 = vsub.f32 %v106, %v131
      %v140 = vmul.f32 %v132, %v132
      %v141 = vmul.f32 %v133, %v133
      %v142 = vmul.f32 %v134, %v134
      %v143 = vmul.f32 %v135, %v135
      %v144 = vmul.f32 %v136, %v136
      %v145 = vmul.f32 %v137, %v137
      %v146 = vmul.f32 %v138, %v138
      %v147 = vmul.f32 %v139, %v139
      %148 = vadd.xlane.f32.xlu0 %v140
      %v149 = vpop.xlane.xlu0 %148
      %150 = vadd.xlane.f32.xlu0 %v141
      %v151 = vpop.xlane.xlu0 %150
      %152 = vadd.xlane.f32.xlu0 %v142
      %v153 = vpop.xlane.xlu0 %152
      %154 = vadd.xlane.f32.xlu0 %v143
      %v155 = vpop.xlane.xlu0 %154
      %156 = vadd.xlane.f32.xlu0 %v144
      %v157 = vpop.xlane.xlu0 %156
      %158 = vadd.xlane.f32.xlu0 %v145
      %v159 = vpop.xlane.xlu0 %158
      %160 = vadd.xlane.f32.xlu0 %v146
      %v161 = vpop.xlane.xlu0 %160
      %162 = vadd.xlane.f32.xlu0 %v147
      %v163 = vpop.xlane.xlu0 %162
      %v164 = vmul.f32 %v149, %v123
      %v165 = vmul.f32 %v151, %v123
      %v166 = vmul.f32 %v153, %v123
      %v167 = vmul.f32 %v155, %v123
      %v168 = vmul.f32 %v157, %v123
      %v169 = vmul.f32 %v159, %v123
      %v170 = vmul.f32 %v161, %v123
      %v171 = vmul.f32 %v163, %v123
      %v172 = vadd.f32 %v164, 1e-05
      %v173 = vadd.f32 %v165, 1e-05
      %v174 = vadd.f32 %v166, 1e-05
      %v175 = vadd.f32 %v167, 1e-05
      %v176 = vadd.f32 %v168, 1e-05
      %v177 = vadd.f32 %v169, 1e-05
      %v178 = vadd.f32 %v170, 1e-05
      %v179 = vadd.f32 %v171, 1e-05
      %v180 = vrsqrt.pop %v172
      %v181 = vrsqrt.pop %v173
      %v182 = vrsqrt.pop %v174
      %v183 = vrsqrt.pop %v175
      %v184 = vrsqrt.pop %v176
      %v185 = vrsqrt.pop %v177
      %v186 = vrsqrt.pop %v178
      %v187 = vrsqrt.pop %v179
      %v188 = vmul.f32 %v132, %v180
      %v189 = vmul.f32 %v133, %v181
      %v190 = vmul.f32 %v134, %v182
      %v191 = vmul.f32 %v135, %v183
      %v192 = vmul.f32 %v136, %v184
      %v193 = vmul.f32 %v137, %v185
      %v194 = vmul.f32 %v138, %v186
      %v195 = vmul.f32 %v139, %v187
      %v196 = vld [vmem:[#allocation8] sm:$0xff]
      %v197 = vld [vmem:[#allocation8 + $0x8] sm:$0xff]
      %v198 = vld [vmem:[#allocation8 + $0x10] sm:$0xff]
      %v199 = vld [vmem:[#allocation8 + $0x18] sm:$0xff]
      %v200 = vld [vmem:[#allocation8 + $0x20] sm:$0xff]
      %v201 = vld [vmem:[#allocation8 + $0x28] sm:$0xff]
      %v202 = vld [vmem:[#allocation8 + $0x30] sm:$0xff]
      %v203 = vld [vmem:[#allocation8 + $0x38] sm:$0xff]
      %v204 = vld [vmem:[#allocation8 + $0x40] sm:$0xff]
      %v205 = vld [vmem:[#allocation8 + $0x48] sm:$0xff]
      %v206 = vld [vmem:[#allocation8 + $0x50] sm:$0xff]
      %v207 = vld [vmem:[#allocation8 + $0x58] sm:$0xff]
      %v208 = vld [vmem:[#allocation8 + $0x60] sm:$0xff]
      %v209 = vld [vmem:[#allocation8 + $0x68] sm:$0xff]
      %v210 = vld [vmem:[#allocation8 + $0x70] sm:$0xff]
      %v211 = vld [vmem:[#allocation8 + $0x78] sm:$0xff]
      %v212 = vld [vmem:[%s3] sm:$0x1]
      %v214 = vlaneseq
      %v215 = vshrl.u32 %v214, 7
      %v216 = vsub.s32 0, %v215
      %v217 = vrot.slane %v212, %v216
      %219 = vmatprep.subr.mxu0 0.0
      %220 = vmatpush1.msra.mxu0 %v196
      %221 = vmatprep.subr.mxu0 0.0
      %222 = vmatpush1.msra.mxu0 %v197
      %223 = vmatprep.subr.mxu0 0.0
      %224 = vmatpush1.msra.mxu0 %v198
      %225 = vmatprep.subr.mxu0 0.0
      %226 = vmatpush1.msra.mxu0 %v199
      %227 = vmatprep.subr.mxu0 0.0
      %228 = vmatpush1.msra.mxu0 %v200
      %229 = vmatprep.subr.mxu0 0.0
      %230 = vmatpush1.msra.mxu0 %v201
      %231 = vmatprep.subr.mxu0 0.0
      %232 = vmatpush1.msra.mxu0 %v202
      %233 = vmatprep.subr.mxu0 0.0
      %234 = vmatpush1.msra.mxu0 %v203
      %235 = vmatprep.subr.mxu0 0.0
      %236 = vmatpush1.msra.mxu0 %v204
      %237 = vmatprep.subr.mxu0 0.0
      %238 = vmatpush1.msra.mxu0 %v205
      %239 = vmatprep.subr.mxu0 0.0
      %240 = vmatpush1.msra.mxu0 %v206
      %241 = vmatprep.subr.mxu0 0.0
      %242 = vmatpush1.msra.mxu0 %v207
      %243 = vmatprep.subr.mxu0 0.0
      %244 = vmatpush1.msra.mxu0 %v208
      %245 = vmatprep.subr.mxu0 0.0
      %246 = vmatpush1.msra.mxu0 %v209
      %247 = vmatprep.subr.mxu0 0.0
      %248 = vmatpush1.msra.mxu0 %v210
      %249 = vmatprep.subr.mxu0 0.0
      %250 = vmatpush1.msra.mxu0 %v211
      %251 = vmatprep.subr.mxu0 0.0
      %252 = vmatpush1.msra.mxu0 0.0
      %253 = vmatprep.subr.mxu0 0.0
      %254 = vmatpush1.msra.mxu0 0.0
      %255 = vmatprep.subr.mxu0 0.0
      %256 = vmatpush1.msra.mxu0 0.0
      %257 = vmatprep.subr.mxu0 0.0
      %258 = vmatpush1.msra.mxu0 0.0
      %259 = vmatprep.subr.mxu0 0.0
      %260 = vmatpush1.msra.mxu0 0.0
      %261 = vmatprep.subr.mxu0 0.0
      %262 = vmatpush1.msra.mxu0 0.0
      %263 = vmatprep.subr.mxu0 0.0
      %264 = vmatpush1.msra.mxu0 0.0
      %265 = vmatprep.subr.mxu0 0.0
      %266 = vmatpush1.msra.mxu0 0.0
      %267 = vmatprep.subr.mxu0 0.0
      %268 = vmatpush1.msra.mxu0 0.0
      %269 = vmatprep.subr.mxu0 0.0
      %270 = vmatpush1.msra.mxu0 0.0
      %271 = vmatprep.subr.mxu0 0.0
      %272 = vmatpush1.msra.mxu0 0.0
      %273 = vmatprep.subr.mxu0 0.0
      %274 = vmatpush1.msra.mxu0 0.0
      %275 = vmatprep.subr.mxu0 0.0
      %276 = vmatpush1.msra.mxu0 0.0
      %277 = vmatprep.subr.mxu0 0.0
      %278 = vmatpush1.msra.mxu0 0.0
      %279 = vmatprep.subr.mxu0 0.0
      %280 = vmatpush1.msra.mxu0 0.0
      %281 = vmatprep.subr.mxu0 0.0
      %282 = vmatpush1.msra.mxu0 0.0
      %283 = vmatprep.mubr.f32.mxu0 0.0
      %284 = vmatmul.mubr.f32.gmra.mrb[0].mxu0 %v188
      %v285 = vpop.f32.mrb[0].mxu0
      %v286 = vadd.f32 %v217, %v285
      %v287 = vpop.f32.mrb[0].mxu0
      %288 = vmatprep.mubr.f32.mxu0 0.0
      %289 = vmatmul.mubr.f32.gmra.mrb[0].mxu0 %v189
      %v290 = vpop.f32.mrb[0].mxu0
      %v291 = vadd.f32 %v217, %v290
      %v292 = vpop.f32.mrb[0].mxu0
      %293 = vmatprep.mubr.f32.mxu0 0.0
      %294 = vmatmul.mubr.f32.gmra.mrb[0].mxu0 %v190
      %v295 = vpop.f32.mrb[0].mxu0
      %v296 = vadd.f32 %v217, %v295
      %v297 = vpop.f32.mrb[0].mxu0
      %298 = vmatprep.mubr.f32.mxu0 0.0
      %299 = vmatmul.mubr.f32.gmra.mrb[0].mxu0 %v191
      %v300 = vpop.f32.mrb[0].mxu0
      %v301 = vadd.f32 %v217, %v300
      %v302 = vpop.f32.mrb[0].mxu0
      %303 = vmatprep.mubr.f32.mxu0 0.0
      %304 = vmatmul.mubr.f32.gmra.mrb[0].mxu0 %v192
      %v305 = vpop.f32.mrb[0].mxu0
      %v306 = vadd.f32 %v217, %v305
      %v307 = vpop.f32.mrb[0].mxu0
      %308 = vmatprep.mubr.f32.mxu0 0.0
      %309 = vmatmul.mubr.f32.gmra.mrb[0].mxu0 %v193
      %v310 = vpop.f32.mrb[0].mxu0
      %v311 = vadd.f32 %v217, %v310
      %v312 = vpop.f32.mrb[0].mxu0
      %313 = vmatprep.mubr.f32.mxu0 0.0
      %314 = vmatmul.mubr.f32.gmra.mrb[0].mxu0 %v194
      %v315 = vpop.f32.mrb[0].mxu0
      %v316 = vadd.f32 %v217, %v315
      %v317 = vpop.f32.mrb[0].mxu0
      %318 = vmatprep.mubr.f32.mxu0 0.0
      %319 = vmatmul.mubr.f32.gmra.mrb[0].mxu0 %v195
      %v320 = vpop.f32.mrb[0].mxu0
      %v321 = vadd.f32 %v217, %v320
      %v322 = vpop.f32.mrb[0].mxu0
      %323 = vdwg.mxu0
      %324 = vst [vmem:[#allocation2] sm:$0xff] %v286
      %325 = vst [vmem:[#allocation2 + $0x8] sm:$0xff] %v291
      %326 = vst [vmem:[#allocation2 + $0x10] sm:$0xff] %v296
      %327 = vst [vmem:[#allocation2 + $0x18] sm:$0xff] %v301
      %328 = vst [vmem:[#allocation2 + $0x20] sm:$0xff] %v306
      %329 = vst [vmem:[#allocation2 + $0x28] sm:$0xff] %v311
      %330 = vst [vmem:[#allocation2 + $0x30] sm:$0xff] %v316
      %331 = vst [vmem:[#allocation2 + $0x38] sm:$0xff] %v321
      %v332 = vld [vmem:[#allocation10] sm:$0xff]
      %v333 = vld [vmem:[#allocation10 + $0x8] sm:$0xff]
      %v334 = vld [vmem:[#allocation10 + $0x10] sm:$0xff]
      %v335 = vld [vmem:[#allocation10 + $0x18] sm:$0xff]
      %v336 = vld [vmem:[#allocation10 + $0x20] sm:$0xff]
      %v337 = vld [vmem:[#allocation10 + $0x28] sm:$0xff]
      %v338 = vld [vmem:[#allocation10 + $0x30] sm:$0xff]
      %v339 = vld [vmem:[#allocation10 + $0x38] sm:$0xff]
      %v340 = vld [vmem:[#allocation10 + $0x40] sm:$0xff]
      %v341 = vld [vmem:[#allocation10 + $0x48] sm:$0xff]
      %v342 = vld [vmem:[#allocation10 + $0x50] sm:$0xff]
      %v343 = vld [vmem:[#allocation10 + $0x58] sm:$0xff]
      %v344 = vld [vmem:[#allocation10 + $0x60] sm:$0xff]
      %v345 = vld [vmem:[#allocation10 + $0x68] sm:$0xff]
      %v346 = vld [vmem:[#allocation10 + $0x70] sm:$0xff]
      %v347 = vld [vmem:[#allocation10 + $0x78] sm:$0xff]
      %v348 = vld [vmem:[#allocation2] sm:$0xff]
      %349 = vmatprep.subr.mxu0 0.0
      %350 = vmatpush1.msra.mxu0 %v332
      %351 = vmatprep.subr.mxu0 0.0
      %352 = vmatpush1.msra.mxu0 %v333
      %353 = vmatprep.subr.mxu0 0.0
      %354 = vmatpush1.msra.mxu0 %v334
      %355 = vmatprep.subr.mxu0 0.0
      %356 = vmatpush1.msra.mxu0 %v335
      %357 = vmatprep.subr.mxu0 0.0
      %358 = vmatpush1.msra.mxu0 %v336
      %359 = vmatprep.subr.mxu0 0.0
      %360 = vmatpush1.msra.mxu0 %v337
      %361 = vmatprep.subr.mxu0 0.0
      %362 = vmatpush1.msra.mxu0 %v338
      %363 = vmatprep.subr.mxu0 0.0
      %364 = vmatpush1.msra.mxu0 %v339
      %365 = vmatprep.subr.mxu0 0.0
      %366 = vmatpush1.msra.mxu0 %v340
      %367 = vmatprep.subr.mxu0 0.0
      %368 = vmatpush1.msra.mxu0 %v341
      %369 = vmatprep.subr.mxu0 0.0
      %370 = vmatpush1.msra.mxu0 %v342
      %371 = vmatprep.subr.mxu0 0.0
      %372 = vmatpush1.msra.mxu0 %v343
      %373 = vmatprep.subr.mxu0 0.0
      %374 = vmatpush1.msra.mxu0 %v344
      %375 = vmatprep.subr.mxu0 0.0
      %376 = vmatpush1.msra.mxu0 %v345
      %377 = vmatprep.subr.mxu0 0.0
      %378 = vmatpush1.msra.mxu0 %v346
      %379 = vmatprep.subr.mxu0 0.0
      %380 = vmatpush1.msra.mxu0 %v347
      %381 = vmatprep.subr.mxu0 0.0
      %382 = vmatpush1.msra.mxu0 0.0
      %383 = vmatprep.subr.mxu0 0.0
      %384 = vmatpush1.msra.mxu0 0.0
      %385 = vmatprep.subr.mxu0 0.0
      %386 = vmatpush1.msra.mxu0 0.0
      %387 = vmatprep.subr.mxu0 0.0
      %388 = vmatpush1.msra.mxu0 0.0
      %389 = vmatprep.subr.mxu0 0.0
      %390 = vmatpush1.msra.mxu0 0.0
      %391 = vmatprep.subr.mxu0 0.0
      %392 = vmatpush1.msra.mxu0 0.0
      %393 = vmatprep.subr.mxu0 0.0
      %394 = vmatpush1.msra.mxu0 0.0
      %395 = vmatprep.subr.mxu0 0.0
      %396 = vmatpush1.msra.mxu0 0.0
      %397 = vmatprep.subr.mxu0 0.0
      %398 = vmatpush1.msra.mxu0 0.0
      %399 = vmatprep.subr.mxu0 0.0
      %400 = vmatpush1.msra.mxu0 0.0
      %401 = vmatprep.subr.mxu0 0.0
      %402 = vmatpush1.msra.mxu0 0.0
      %403 = vmatprep.subr.mxu0 0.0
      %404 = vmatpush1.msra.mxu0 0.0
      %405 = vmatprep.subr.mxu0 0.0
      %406 = vmatpush1.msra.mxu0 0.0
      %407 = vmatprep.subr.mxu0 0.0
      %408 = vmatpush1.msra.mxu0 0.0
      %409 = vmatprep.subr.mxu0 0.0
      %410 = vmatpush1.msra.mxu0 0.0
      %411 = vmatprep.subr.mxu0 0.0
      %412 = vmatpush1.msra.mxu0 0.0
      %413 = vmatprep.mubr.f32.mxu0 0.0
      %414 = vmatmul.mubr.f32.gmra.mrb[0].mxu0 0.0
      %v415 = vpop.f32.mrb[0].mxu0
      %v416 = vadd.f32 0.0, %v415
      %v417 = vpop.f32.mrb[0].mxu0
      %418 = vdwg.mxu0
      %v419 = vadd.f32 %v348, %v416
      %v420 = vtanh.pop %v419
      %421 = vst [vmem:[#allocation3] sm:$0xff] %v420
      %v422 = vld [vmem:[#allocation2 + $0x8] sm:$0xff]
      %423 = vmatprep.subr.mxu0 0.0
      %424 = vmatpush1.msra.mxu0 %v332
      %425 = vmatprep.subr.mxu0 0.0
      %426 = vmatpush1.msra.mxu0 %v333
      %427 = vmatprep.subr.mxu0 0.0
      %428 = vmatpush1.msra.mxu0 %v334
      %429 = vmatprep.subr.mxu0 0.0
      %430 = vmatpush1.msra.mxu0 %v335
      %431 = vmatprep.subr.mxu0 0.0
      %432 = vmatpush1.msra.mxu0 %v336
      %433 = vmatprep.subr.mxu0 0.0
      %434 = vmatpush1.msra.mxu0 %v337
      %435 = vmatprep.subr.mxu0 0.0
      %436 = vmatpush1.msra.mxu0 %v338
      %437 = vmatprep.subr.mxu0 0.0
      %438 = vmatpush1.msra.mxu0 %v339
      %439 = vmatprep.subr.mxu0 0.0
      %440 = vmatpush1.msra.mxu0 %v340
      %441 = vmatprep.subr.mxu0 0.0
      %442 = vmatpush1.msra.mxu0 %v341
      %443 = vmatprep.subr.mxu0 0.0
      %444 = vmatpush1.msra.mxu0 %v342
      %445 = vmatprep.subr.mxu0 0.0
      %446 = vmatpush1.msra.mxu0 %v343
      %447 = vmatprep.subr.mxu0 0.0
      %448 = vmatpush1.msra.mxu0 %v344
      %449 = vmatprep.subr.mxu0 0.0
      %450 = vmatpush1.msra.mxu0 %v345
      %451 = vmatprep.subr.mxu0 0.0
      %452 = vmatpush1.msra.mxu0 %v346
      %453 = vmatprep.subr.mxu0 0.0
      %454 = vmatpush1.msra.mxu0 %v347
      %455 = vmatprep.subr.mxu0 0.0
      %456 = vmatpush1.msra.mxu0 0.0
      %457 = vmatprep.subr.mxu0 0.0
      %458 = vmatpush1.msra.mxu0 0.0
      %459 = vmatprep.subr.mxu0 0.0
      %460 = vmatpush1.msra.mxu0 0.0
      %461 = vmatprep.subr.mxu0 0.0
      %462 = vmatpush1.msra.mxu0 0.0
      %463 = vmatprep.subr.mxu0 0.0
      %464 = vmatpush1.msra.mxu0 0.0
      %465 = vmatprep.subr.mxu0 0.0
      %466 = vmatpush1.msra.mxu0 0.0
      %467 = vmatprep.subr.mxu0 0.0
      %468 = vmatpush1.msra.mxu0 0.0
      %469 = vmatprep.subr.mxu0 0.0
      %470 = vmatpush1.msra.mxu0 0.0
      %471 = vmatprep.subr.mxu0 0.0
      %472 = vmatpush1.msra.mxu0 0.0
      %473 = vmatprep.subr.mxu0 0.0
      %474 = vmatpush1.msra.mxu0 0.0
      %475 = vmatprep.subr.mxu0 0.0
      %476 = vmatpush1.msra.mxu0 0.0
      %477 = vmatprep.subr.mxu0 0.0
      %478 = vmatpush1.msra.mxu0 0.0
      %479 = vmatprep.subr.mxu0 0.0
      %480 = vmatpush1.msra.mxu0 0.0
      %481 = vmatprep.subr.mxu0 0.0
      %482 = vmatpush1.msra.mxu0 0.0
      %483 = vmatprep.subr.mxu0 0.0
      %484 = vmatpush1.msra.mxu0 0.0
      %485 = vmatprep.subr.mxu0 0.0
      %486 = vmatpush1.msra.mxu0 0.0
      %487 = vmatprep.mubr.f32.mxu0 0.0
      %488 = vmatmul.mubr.f32.gmra.mrb[0].mxu0 %v420
      %v489 = vpop.f32.mrb[0].mxu0
      %v490 = vadd.f32 0.0, %v489
      %v491 = vpop.f32.mrb[0].mxu0
      %492 = vdwg.mxu0
      %v493 = vadd.f32 %v422, %v490
      %v494 = vtanh.pop %v493
      %495 = vst [vmem:[#allocation3 + $0x8] sm:$0xff] %v494
      %v496 = vld [vmem:[#allocation2 + $0x10] sm:$0xff]
      %497 = vmatprep.subr.mxu0 0.0
      %498 = vmatpush1.msra.mxu0 %v332
      %499 = vmatprep.subr.mxu0 0.0
      %500 = vmatpush1.msra.mxu0 %v333
      %501 = vmatprep.subr.mxu0 0.0
      %502 = vmatpush1.msra.mxu0 %v334
      %503 = vmatprep.subr.mxu0 0.0
      %504 = vmatpush1.msra.mxu0 %v335
      %505 = vmatprep.subr.mxu0 0.0
      %506 = vmatpush1.msra.mxu0 %v336
      %507 = vmatprep.subr.mxu0 0.0
      %508 = vmatpush1.msra.mxu0 %v337
      %509 = vmatprep.subr.mxu0 0.0
      %510 = vmatpush1.msra.mxu0 %v338
      %511 = vmatprep.subr.mxu0 0.0
      %512 = vmatpush1.msra.mxu0 %v339
      %513 = vmatprep.subr.mxu0 0.0
      %514 = vmatpush1.msra.mxu0 %v340
      %515 = vmatprep.subr.mxu0 0.0
      %516 = vmatpush1.msra.mxu0 %v341
      %517 = vmatprep.subr.mxu0 0.0
      %518 = vmatpush1.msra.mxu0 %v342
      %519 = vmatprep.subr.mxu0 0.0
      %520 = vmatpush1.msra.mxu0 %v343
      %521 = vmatprep.subr.mxu0 0.0
      %522 = vmatpush1.msra.mxu0 %v344
      %523 = vmatprep.subr.mxu0 0.0
      %524 = vmatpush1.msra.mxu0 %v345
      %525 = vmatprep.subr.mxu0 0.0
      %526 = vmatpush1.msra.mxu0 %v346
      %527 = vmatprep.subr.mxu0 0.0
      %528 = vmatpush1.msra.mxu0 %v347
      %529 = vmatprep.subr.mxu0 0.0
      %530 = vmatpush1.msra.mxu0 0.0
      %531 = vmatprep.subr.mxu0 0.0
      %532 = vmatpush1.msra.mxu0 0.0
      %533 = vmatprep.subr.mxu0 0.0
      %534 = vmatpush1.msra.mxu0 0.0
      %535 = vmatprep.subr.mxu0 0.0
      %536 = vmatpush1.msra.mxu0 0.0
      %537 = vmatprep.subr.mxu0 0.0
      %538 = vmatpush1.msra.mxu0 0.0
      %539 = vmatprep.subr.mxu0 0.0
      %540 = vmatpush1.msra.mxu0 0.0
      %541 = vmatprep.subr.mxu0 0.0
      %542 = vmatpush1.msra.mxu0 0.0
      %543 = vmatprep.subr.mxu0 0.0
      %544 = vmatpush1.msra.mxu0 0.0
      %545 = vmatprep.subr.mxu0 0.0
      %546 = vmatpush1.msra.mxu0 0.0
      %547 = vmatprep.subr.mxu0 0.0
      %548 = vmatpush1.msra.mxu0 0.0
      %549 = vmatprep.subr.mxu0 0.0
      %550 = vmatpush1.msra.mxu0 0.0
      %551 = vmatprep.subr.mxu0 0.0
      %552 = vmatpush1.msra.mxu0 0.0
      %553 = vmatprep.subr.mxu0 0.0
      %554 = vmatpush1.msra.mxu0 0.0
      %555 = vmatprep.subr.mxu0 0.0
      %556 = vmatpush1.msra.mxu0 0.0
      %557 = vmatprep.subr.mxu0 0.0
      %558 = vmatpush1.msra.mxu0 0.0
      %559 = vmatprep.subr.mxu0 0.0
      %560 = vmatpush1.msra.mxu0 0.0
      %561 = vmatprep.mubr.f32.mxu0 0.0
      %562 = vmatmul.mubr.f32.gmra.mrb[0].mxu0 %v494
      %v563 = vpop.f32.mrb[0].mxu0
      %v564 = vadd.f32 0.0, %v563
      %v565 = vpop.f32.mrb[0].mxu0
      %566 = vdwg.mxu0
      %v567 = vadd.f32 %v496, %v564
      %v568 = vtanh.pop %v567
      %569 = vst [vmem:[#allocation3 + $0x10] sm:$0xff] %v568
      %v570 = vld [vmem:[#allocation2 + $0x18] sm:$0xff]
      %571 = vmatprep.subr.mxu0 0.0
      %572 = vmatpush1.msra.mxu0 %v332
      %573 = vmatprep.subr.mxu0 0.0
      %574 = vmatpush1.msra.mxu0 %v333
      %575 = vmatprep.subr.mxu0 0.0
      %576 = vmatpush1.msra.mxu0 %v334
      %577 = vmatprep.subr.mxu0 0.0
      %578 = vmatpush1.msra.mxu0 %v335
      %579 = vmatprep.subr.mxu0 0.0
      %580 = vmatpush1.msra.mxu0 %v336
      %581 = vmatprep.subr.mxu0 0.0
      %582 = vmatpush1.msra.mxu0 %v337
      %583 = vmatprep.subr.mxu0 0.0
      %584 = vmatpush1.msra.mxu0 %v338
      %585 = vmatprep.subr.mxu0 0.0
      %586 = vmatpush1.msra.mxu0 %v339
      %587 = vmatprep.subr.mxu0 0.0
      %588 = vmatpush1.msra.mxu0 %v340
      %589 = vmatprep.subr.mxu0 0.0
      %590 = vmatpush1.msra.mxu0 %v341
      %591 = vmatprep.subr.mxu0 0.0
      %592 = vmatpush1.msra.mxu0 %v342
      %593 = vmatprep.subr.mxu0 0.0
      %594 = vmatpush1.msra.mxu0 %v343
      %595 = vmatprep.subr.mxu0 0.0
      %596 = vmatpush1.msra.mxu0 %v344
      %597 = vmatprep.subr.mxu0 0.0
      %598 = vmatpush1.msra.mxu0 %v345
      %599 = vmatprep.subr.mxu0 0.0
      %600 = vmatpush1.msra.mxu0 %v346
      %601 = vmatprep.subr.mxu0 0.0
      %602 = vmatpush1.msra.mxu0 %v347
      %603 = vmatprep.subr.mxu0 0.0
      %604 = vmatpush1.msra.mxu0 0.0
      %605 = vmatprep.subr.mxu0 0.0
      %606 = vmatpush1.msra.mxu0 0.0
      %607 = vmatprep.subr.mxu0 0.0
      %608 = vmatpush1.msra.mxu0 0.0
      %609 = vmatprep.subr.mxu0 0.0
      %610 = vmatpush1.msra.mxu0 0.0
      %611 = vmatprep.subr.mxu0 0.0
      %612 = vmatpush1.msra.mxu0 0.0
      %613 = vmatprep.subr.mxu0 0.0
      %614 = vmatpush1.msra.mxu0 0.0
      %615 = vmatprep.subr.mxu0 0.0
      %616 = vmatpush1.msra.mxu0 0.0
      %617 = vmatprep.subr.mxu0 0.0
      %618 = vmatpush1.msra.mxu0 0.0
      %619 = vmatprep.subr.mxu0 0.0
      %620 = vmatpush1.msra.mxu0 0.0
      %621 = vmatprep.subr.mxu0 0.0
      %622 = vmatpush1.msra.mxu0 0.0
      %623 = vmatprep.subr.mxu0 0.0
      %624 = vmatpush1.msra.mxu0 0.0
      %625 = vmatprep.subr.mxu0 0.0
      %626 = vmatpush1.msra.mxu0 0.0
      %627 = vmatprep.subr.mxu0 0.0
      %628 = vmatpush1.msra.mxu0 0.0
      %629 = vmatprep.subr.mxu0 0.0
      %630 = vmatpush1.msra.mxu0 0.0
      %631 = vmatprep.subr.mxu0 0.0
      %632 = vmatpush1.msra.mxu0 0.0
      %633 = vmatprep.subr.mxu0 0.0
      %634 = vmatpush1.msra.mxu0 0.0
      %635 = vmatprep.mubr.f32.mxu0 0.0
      %636 = vmatmul.mubr.f32.gmra.mrb[0].mxu0 %v568
      %v637 = vpop.f32.mrb[0].mxu0
      %v638 = vadd.f32 0.0, %v637
      %v639 = vpop.f32.mrb[0].mxu0
      %640 = vdwg.mxu0
      %v641 = vadd.f32 %v570, %v638
      %v642 = vtanh.pop %v641
      %643 = vst [vmem:[#allocation3 + $0x18] sm:$0xff] %v642
      %v644 = vld [vmem:[#allocation2 + $0x20] sm:$0xff]
      %645 = vmatprep.subr.mxu0 0.0
      %646 = vmatpush1.msra.mxu0 %v332
      %647 = vmatprep.subr.mxu0 0.0
      %648 = vmatpush1.msra.mxu0 %v333
      %649 = vmatprep.subr.mxu0 0.0
      %650 = vmatpush1.msra.mxu0 %v334
      %651 = vmatprep.subr.mxu0 0.0
      %652 = vmatpush1.msra.mxu0 %v335
      %653 = vmatprep.subr.mxu0 0.0
      %654 = vmatpush1.msra.mxu0 %v336
      %655 = vmatprep.subr.mxu0 0.0
      %656 = vmatpush1.msra.mxu0 %v337
      %657 = vmatprep.subr.mxu0 0.0
      %658 = vmatpush1.msra.mxu0 %v338
      %659 = vmatprep.subr.mxu0 0.0
      %660 = vmatpush1.msra.mxu0 %v339
      %661 = vmatprep.subr.mxu0 0.0
      %662 = vmatpush1.msra.mxu0 %v340
      %663 = vmatprep.subr.mxu0 0.0
      %664 = vmatpush1.msra.mxu0 %v341
      %665 = vmatprep.subr.mxu0 0.0
      %666 = vmatpush1.msra.mxu0 %v342
      %667 = vmatprep.subr.mxu0 0.0
      %668 = vmatpush1.msra.mxu0 %v343
      %669 = vmatprep.subr.mxu0 0.0
      %670 = vmatpush1.msra.mxu0 %v344
      %671 = vmatprep.subr.mxu0 0.0
      %672 = vmatpush1.msra.mxu0 %v345
      %673 = vmatprep.subr.mxu0 0.0
      %674 = vmatpush1.msra.mxu0 %v346
      %675 = vmatprep.subr.mxu0 0.0
      %676 = vmatpush1.msra.mxu0 %v347
      %677 = vmatprep.subr.mxu0 0.0
      %678 = vmatpush1.msra.mxu0 0.0
      %679 = vmatprep.subr.mxu0 0.0
      %680 = vmatpush1.msra.mxu0 0.0
      %681 = vmatprep.subr.mxu0 0.0
      %682 = vmatpush1.msra.mxu0 0.0
      %683 = vmatprep.subr.mxu0 0.0
      %684 = vmatpush1.msra.mxu0 0.0
      %685 = vmatprep.subr.mxu0 0.0
      %686 = vmatpush1.msra.mxu0 0.0
      %687 = vmatprep.subr.mxu0 0.0
      %688 = vmatpush1.msra.mxu0 0.0
      %689 = vmatprep.subr.mxu0 0.0
      %690 = vmatpush1.msra.mxu0 0.0
      %691 = vmatprep.subr.mxu0 0.0
      %692 = vmatpush1.msra.mxu0 0.0
      %693 = vmatprep.subr.mxu0 0.0
      %694 = vmatpush1.msra.mxu0 0.0
      %695 = vmatprep.subr.mxu0 0.0
      %696 = vmatpush1.msra.mxu0 0.0
      %697 = vmatprep.subr.mxu0 0.0
      %698 = vmatpush1.msra.mxu0 0.0
      %699 = vmatprep.subr.mxu0 0.0
      %700 = vmatpush1.msra.mxu0 0.0
      %701 = vmatprep.subr.mxu0 0.0
      %702 = vmatpush1.msra.mxu0 0.0
      %703 = vmatprep.subr.mxu0 0.0
      %704 = vmatpush1.msra.mxu0 0.0
      %705 = vmatprep.subr.mxu0 0.0
      %706 = vmatpush1.msra.mxu0 0.0
      %707 = vmatprep.subr.mxu0 0.0
      %708 = vmatpush1.msra.mxu0 0.0
      %709 = vmatprep.mubr.f32.mxu0 0.0
      %710 = vmatmul.mubr.f32.gmra.mrb[0].mxu0 %v642
      %v711 = vpop.f32.mrb[0].mxu0
      %v712 = vadd.f32 0.0, %v711
      %v713 = vpop.f32.mrb[0].mxu0
      %714 = vdwg.mxu0
      %v715 = vadd.f32 %v644, %v712
      %v716 = vtanh.pop %v715
      %717 = vst [vmem:[#allocation3 + $0x20] sm:$0xff] %v716
      %v718 = vld [vmem:[#allocation2 + $0x28] sm:$0xff]
      %719 = vmatprep.subr.mxu0 0.0
      %720 = vmatpush1.msra.mxu0 %v332
      %721 = vmatprep.subr.mxu0 0.0
      %722 = vmatpush1.msra.mxu0 %v333
      %723 = vmatprep.subr.mxu0 0.0
      %724 = vmatpush1.msra.mxu0 %v334
      %725 = vmatprep.subr.mxu0 0.0
      %726 = vmatpush1.msra.mxu0 %v335
      %727 = vmatprep.subr.mxu0 0.0
      %728 = vmatpush1.msra.mxu0 %v336
      %729 = vmatprep.subr.mxu0 0.0
      %730 = vmatpush1.msra.mxu0 %v337
      %731 = vmatprep.subr.mxu0 0.0
      %732 = vmatpush1.msra.mxu0 %v338
      %733 = vmatprep.subr.mxu0 0.0
      %734 = vmatpush1.msra.mxu0 %v339
      %735 = vmatprep.subr.mxu0 0.0
      %736 = vmatpush1.msra.mxu0 %v340
      %737 = vmatprep.subr.mxu0 0.0
      %738 = vmatpush1.msra.mxu0 %v341
      %739 = vmatprep.subr.mxu0 0.0
      %740 = vmatpush1.msra.mxu0 %v342
      %741 = vmatprep.subr.mxu0 0.0
      %742 = vmatpush1.msra.mxu0 %v343
      %743 = vmatprep.subr.mxu0 0.0
      %744 = vmatpush1.msra.mxu0 %v344
      %745 = vmatprep.subr.mxu0 0.0
      %746 = vmatpush1.msra.mxu0 %v345
      %747 = vmatprep.subr.mxu0 0.0
      %748 = vmatpush1.msra.mxu0 %v346
      %749 = vmatprep.subr.mxu0 0.0
      %750 = vmatpush1.msra.mxu0 %v347
      %751 = vmatprep.subr.mxu0 0.0
      %752 = vmatpush1.msra.mxu0 0.0
      %753 = vmatprep.subr.mxu0 0.0
      %754 = vmatpush1.msra.mxu0 0.0
      %755 = vmatprep.subr.mxu0 0.0
      %756 = vmatpush1.msra.mxu0 0.0
      %757 = vmatprep.subr.mxu0 0.0
      %758 = vmatpush1.msra.mxu0 0.0
      %759 = vmatprep.subr.mxu0 0.0
      %760 = vmatpush1.msra.mxu0 0.0
      %761 = vmatprep.subr.mxu0 0.0
      %762 = vmatpush1.msra.mxu0 0.0
      %763 = vmatprep.subr.mxu0 0.0
      %764 = vmatpush1.msra.mxu0 0.0
      %765 = vmatprep.subr.mxu0 0.0
      %766 = vmatpush1.msra.mxu0 0.0
      %767 = vmatprep.subr.mxu0 0.0
      %768 = vmatpush1.msra.mxu0 0.0
      %769 = vmatprep.subr.mxu0 0.0
      %770 = vmatpush1.msra.mxu0 0.0
      %771 = vmatprep.subr.mxu0 0.0
      %772 = vmatpush1.msra.mxu0 0.0
      %773 = vmatprep.subr.mxu0 0.0
      %774 = vmatpush1.msra.mxu0 0.0
      %775 = vmatprep.subr.mxu0 0.0
      %776 = vmatpush1.msra.mxu0 0.0
      %777 = vmatprep.subr.mxu0 0.0
      %778 = vmatpush1.msra.mxu0 0.0
      %779 = vmatprep.subr.mxu0 0.0
      %780 = vmatpush1.msra.mxu0 0.0
      %781 = vmatprep.subr.mxu0 0.0
      %782 = vmatpush1.msra.mxu0 0.0
      %783 = vmatprep.mubr.f32.mxu0 0.0
      %784 = vmatmul.mubr.f32.gmra.mrb[0].mxu0 %v716
      %v785 = vpop.f32.mrb[0].mxu0
      %v786 = vadd.f32 0.0, %v785
      %v787 = vpop.f32.mrb[0].mxu0
      %788 = vdwg.mxu0
      %v789 = vadd.f32 %v718, %v786
      %v790 = vtanh.pop %v789
      %791 = vst [vmem:[#allocation3 + $0x28] sm:$0xff] %v790
      %v792 = vld [vmem:[#allocation2 + $0x30] sm:$0xff]
      %793 = vmatprep.subr.mxu0 0.0
      %794 = vmatpush1.msra.mxu0 %v332
      %795 = vmatprep.subr.mxu0 0.0
      %796 = vmatpush1.msra.mxu0 %v333
      %797 = vmatprep.subr.mxu0 0.0
      %798 = vmatpush1.msra.mxu0 %v334
      %799 = vmatprep.subr.mxu0 0.0
      %800 = vmatpush1.msra.mxu0 %v335
      %801 = vmatprep.subr.mxu0 0.0
      %802 = vmatpush1.msra.mxu0 %v336
      %803 = vmatprep.subr.mxu0 0.0
      %804 = vmatpush1.msra.mxu0 %v337
      %805 = vmatprep.subr.mxu0 0.0
      %806 = vmatpush1.msra.mxu0 %v338
      %807 = vmatprep.subr.mxu0 0.0
      %808 = vmatpush1.msra.mxu0 %v339
      %809 = vmatprep.subr.mxu0 0.0
      %810 = vmatpush1.msra.mxu0 %v340
      %811 = vmatprep.subr.mxu0 0.0
      %812 = vmatpush1.msra.mxu0 %v341
      %813 = vmatprep.subr.mxu0 0.0
      %814 = vmatpush1.msra.mxu0 %v342
      %815 = vmatprep.subr.mxu0 0.0
      %816 = vmatpush1.msra.mxu0 %v343
      %817 = vmatprep.subr.mxu0 0.0
      %818 = vmatpush1.msra.mxu0 %v344
      %819 = vmatprep.subr.mxu0 0.0
      %820 = vmatpush1.msra.mxu0 %v345
      %821 = vmatprep.subr.mxu0 0.0
      %822 = vmatpush1.msra.mxu0 %v346
      %823 = vmatprep.subr.mxu0 0.0
      %824 = vmatpush1.msra.mxu0 %v347
      %825 = vmatprep.subr.mxu0 0.0
      %826 = vmatpush1.msra.mxu0 0.0
      %827 = vmatprep.subr.mxu0 0.0
      %828 = vmatpush1.msra.mxu0 0.0
      %829 = vmatprep.subr.mxu0 0.0
      %830 = vmatpush1.msra.mxu0 0.0
      %831 = vmatprep.subr.mxu0 0.0
      %832 = vmatpush1.msra.mxu0 0.0
      %833 = vmatprep.subr.mxu0 0.0
      %834 = vmatpush1.msra.mxu0 0.0
      %835 = vmatprep.subr.mxu0 0.0
      %836 = vmatpush1.msra.mxu0 0.0
      %837 = vmatprep.subr.mxu0 0.0
      %838 = vmatpush1.msra.mxu0 0.0
      %839 = vmatprep.subr.mxu0 0.0
      %840 = vmatpush1.msra.mxu0 0.0
      %841 = vmatprep.subr.mxu0 0.0
      %842 = vmatpush1.msra.mxu0 0.0
      %843 = vmatprep.subr.mxu0 0.0
      %844 = vmatpush1.msra.mxu0 0.0
      %845 = vmatprep.subr.mxu0 0.0
      %846 = vmatpush1.msra.mxu0 0.0
      %847 = vmatprep.subr.mxu0 0.0
      %848 = vmatpush1.msra.mxu0 0.0
      %849 = vmatprep.subr.mxu0 0.0
      %850 = vmatpush1.msra.mxu0 0.0
      %851 = vmatprep.subr.mxu0 0.0
      %852 = vmatpush1.msra.mxu0 0.0
      %853 = vmatprep.subr.mxu0 0.0
      %854 = vmatpush1.msra.mxu0 0.0
      %855 = vmatprep.subr.mxu0 0.0
      %856 = vmatpush1.msra.mxu0 0.0
      %857 = vmatprep.mubr.f32.mxu0 0.0
      %858 = vmatmul.mubr.f32.gmra.mrb[0].mxu0 %v790
      %v859 = vpop.f32.mrb[0].mxu0
      %v860 = vadd.f32 0.0, %v859
      %v861 = vpop.f32.mrb[0].mxu0
      %862 = vdwg.mxu0
      %v863 = vadd.f32 %v792, %v860
      %v864 = vtanh.pop %v863
      %865 = vst [vmem:[#allocation3 + $0x30] sm:$0xff] %v864
      %v866 = vld [vmem:[#allocation2 + $0x38] sm:$0xff]
      %867 = vmatprep.subr.mxu0 0.0
      %868 = vmatpush1.msra.mxu0 %v332
      %869 = vmatprep.subr.mxu0 0.0
      %870 = vmatpush1.msra.mxu0 %v333
      %871 = vmatprep.subr.mxu0 0.0
      %872 = vmatpush1.msra.mxu0 %v334
      %873 = vmatprep.subr.mxu0 0.0
      %874 = vmatpush1.msra.mxu0 %v335
      %875 = vmatprep.subr.mxu0 0.0
      %876 = vmatpush1.msra.mxu0 %v336
      %877 = vmatprep.subr.mxu0 0.0
      %878 = vmatpush1.msra.mxu0 %v337
      %879 = vmatprep.subr.mxu0 0.0
      %880 = vmatpush1.msra.mxu0 %v338
      %881 = vmatprep.subr.mxu0 0.0
      %882 = vmatpush1.msra.mxu0 %v339
      %883 = vmatprep.subr.mxu0 0.0
      %884 = vmatpush1.msra.mxu0 %v340
      %885 = vmatprep.subr.mxu0 0.0
      %886 = vmatpush1.msra.mxu0 %v341
      %887 = vmatprep.subr.mxu0 0.0
      %888 = vmatpush1.msra.mxu0 %v342
      %889 = vmatprep.subr.mxu0 0.0
      %890 = vmatpush1.msra.mxu0 %v343
      %891 = vmatprep.subr.mxu0 0.0
      %892 = vmatpush1.msra.mxu0 %v344
      %893 = vmatprep.subr.mxu0 0.0
      %894 = vmatpush1.msra.mxu0 %v345
      %895 = vmatprep.subr.mxu0 0.0
      %896 = vmatpush1.msra.mxu0 %v346
      %897 = vmatprep.subr.mxu0 0.0
      %898 = vmatpush1.msra.mxu0 %v347
      %899 = vmatprep.subr.mxu0 0.0
      %900 = vmatpush1.msra.mxu0 0.0
      %901 = vmatprep.subr.mxu0 0.0
      %902 = vmatpush1.msra.mxu0 0.0
      %903 = vmatprep.subr.mxu0 0.0
      %904 = vmatpush1.msra.mxu0 0.0
      %905 = vmatprep.subr.mxu0 0.0
      %906 = vmatpush1.msra.mxu0 0.0
      %907 = vmatprep.subr.mxu0 0.0
      %908 = vmatpush1.msra.mxu0 0.0
      %909 = vmatprep.subr.mxu0 0.0
      %910 = vmatpush1.msra.mxu0 0.0
      %911 = vmatprep.subr.mxu0 0.0
      %912 = vmatpush1.msra.mxu0 0.0
      %913 = vmatprep.subr.mxu0 0.0
      %914 = vmatpush1.msra.mxu0 0.0
      %915 = vmatprep.subr.mxu0 0.0
      %916 = vmatpush1.msra.mxu0 0.0
      %917 = vmatprep.subr.mxu0 0.0
      %918 = vmatpush1.msra.mxu0 0.0
      %919 = vmatprep.subr.mxu0 0.0
      %920 = vmatpush1.msra.mxu0 0.0
      %921 = vmatprep.subr.mxu0 0.0
      %922 = vmatpush1.msra.mxu0 0.0
      %923 = vmatprep.subr.mxu0 0.0
      %924 = vmatpush1.msra.mxu0 0.0
      %925 = vmatprep.subr.mxu0 0.0
      %926 = vmatpush1.msra.mxu0 0.0
      %927 = vmatprep.subr.mxu0 0.0
      %928 = vmatpush1.msra.mxu0 0.0
      %929 = vmatprep.subr.mxu0 0.0
      %930 = vmatpush1.msra.mxu0 0.0
      %931 = vmatprep.mubr.f32.mxu0 0.0
      %932 = vmatmul.mubr.f32.gmra.mrb[0].mxu0 %v864
      %v933 = vpop.f32.mrb[0].mxu0
      %v934 = vadd.f32 0.0, %v933
      %v935 = vpop.f32.mrb[0].mxu0
      %936 = vdwg.mxu0
      %v937 = vadd.f32 %v866, %v934
      %v938 = vtanh.pop %v937
      %939 = vst [vmem:[#allocation3 + $0x38] sm:$0xff] %v938
      %v940 = vld [vmem:[#allocation3] sm:$0xff]
      %v941 = vld [vmem:[#allocation3 + $0x8] sm:$0xff]
      %v942 = vld [vmem:[#allocation3 + $0x10] sm:$0xff]
      %v943 = vld [vmem:[#allocation3 + $0x18] sm:$0xff]
      %v944 = vld [vmem:[#allocation3 + $0x20] sm:$0xff]
      %v945 = vld [vmem:[#allocation3 + $0x28] sm:$0xff]
      %v946 = vld [vmem:[#allocation3 + $0x30] sm:$0xff]
      %v947 = vld [vmem:[#allocation3 + $0x38] sm:$0xff]
      %v948 = vld [vmem:[#allocation11] sm:$0xff]
      %v949 = vld [vmem:[#allocation11 + $0x8] sm:$0xff]
      %v950 = vld [vmem:[#allocation11 + $0x10] sm:$0xff]
      %v951 = vld [vmem:[#allocation11 + $0x18] sm:$0xff]
      %v952 = vld [vmem:[#allocation11 + $0x20] sm:$0xff]
      %v953 = vld [vmem:[#allocation11 + $0x28] sm:$0xff]
      %v954 = vld [vmem:[#allocation11 + $0x30] sm:$0xff]
      %v955 = vld [vmem:[#allocation11 + $0x38] sm:$0xff]
      %v956 = vld [vmem:[#allocation11 + $0x40] sm:$0xff]
      %v957 = vld [vmem:[#allocation11 + $0x48] sm:$0xff]
      %v958 = vld [vmem:[#allocation11 + $0x50] sm:$0xff]
      %v959 = vld [vmem:[#allocation11 + $0x58] sm:$0xff]
      %v960 = vld [vmem:[#allocation11 + $0x60] sm:$0xff]
      %v961 = vld [vmem:[#allocation11 + $0x68] sm:$0xff]
      %v962 = vld [vmem:[#allocation11 + $0x70] sm:$0xff]
      %v963 = vld [vmem:[#allocation11 + $0x78] sm:$0xff]
      %v964 = vld [vmem:[%s5] sm:$0x1]
      %v966 = vlaneseq
      %v967 = vshrl.u32 %v966, 7
      %v968 = vsub.s32 0, %v967
      %v969 = vrot.slane %v964, %v968
      %971 = vmatprep.subr.mxu0 0.0
      %972 = vmatpush1.msra.mxu0 %v948
      %973 = vmatprep.subr.mxu0 0.0
      %974 = vmatpush1.msra.mxu0 %v949
      %975 = vmatprep.subr.mxu0 0.0
      %976 = vmatpush1.msra.mxu0 %v950
      %977 = vmatprep.subr.mxu0 0.0
      %978 = vmatpush1.msra.mxu0 %v951
      %979 = vmatprep.subr.mxu0 0.0
      %980 = vmatpush1.msra.mxu0 %v952
      %981 = vmatprep.subr.mxu0 0.0
      %982 = vmatpush1.msra.mxu0 %v953
      %983 = vmatprep.subr.mxu0 0.0
      %984 = vmatpush1.msra.mxu0 %v954
      %985 = vmatprep.subr.mxu0 0.0
      %986 = vmatpush1.msra.mxu0 %v955
      %987 = vmatprep.subr.mxu0 0.0
      %988 = vmatpush1.msra.mxu0 %v956
      %989 = vmatprep.subr.mxu0 0.0
      %990 = vmatpush1.msra.mxu0 %v957
      %991 = vmatprep.subr.mxu0 0.0
      %992 = vmatpush1.msra.mxu0 %v958
      %993 = vmatprep.subr.mxu0 0.0
      %994 = vmatpush1.msra.mxu0 %v959
      %995 = vmatprep.subr.mxu0 0.0
      %996 = vmatpush1.msra.mxu0 %v960
      %997 = vmatprep.subr.mxu0 0.0
      %998 = vmatpush1.msra.mxu0 %v961
      %999 = vmatprep.subr.mxu0 0.0
      %1000 = vmatpush1.msra.mxu0 %v962
      %1001 = vmatprep.subr.mxu0 0.0
      %1002 = vmatpush1.msra.mxu0 %v963
      %1003 = vmatprep.subr.mxu0 0.0
      %1004 = vmatpush1.msra.mxu0 0.0
      %1005 = vmatprep.subr.mxu0 0.0
      %1006 = vmatpush1.msra.mxu0 0.0
      %1007 = vmatprep.subr.mxu0 0.0
      %1008 = vmatpush1.msra.mxu0 0.0
      %1009 = vmatprep.subr.mxu0 0.0
      %1010 = vmatpush1.msra.mxu0 0.0
      %1011 = vmatprep.subr.mxu0 0.0
      %1012 = vmatpush1.msra.mxu0 0.0
      %1013 = vmatprep.subr.mxu0 0.0
      %1014 = vmatpush1.msra.mxu0 0.0
      %1015 = vmatprep.subr.mxu0 0.0
      %1016 = vmatpush1.msra.mxu0 0.0
      %1017 = vmatprep.subr.mxu0 0.0
      %1018 = vmatpush1.msra.mxu0 0.0
      %1019 = vmatprep.subr.mxu0 0.0
      %1020 = vmatpush1.msra.mxu0 0.0
      %1021 = vmatprep.subr.mxu0 0.0
      %1022 = vmatpush1.msra.mxu0 0.0
      %1023 = vmatprep.subr.mxu0 0.0
      %1024 = vmatpush1.msra.mxu0 0.0
      %1025 = vmatprep.subr.mxu0 0.0
      %1026 = vmatpush1.msra.mxu0 0.0
      %1027 = vmatprep.subr.mxu0 0.0
      %1028 = vmatpush1.msra.mxu0 0.0
      %1029 = vmatprep.subr.mxu0 0.0
      %1030 = vmatpush1.msra.mxu0 0.0
      %1031 = vmatprep.subr.mxu0 0.0
      %1032 = vmatpush1.msra.mxu0 0.0
      %1033 = vmatprep.subr.mxu0 0.0
      %1034 = vmatpush1.msra.mxu0 0.0
      %1035 = vmatprep.mubr.f32.mxu0 0.0
      %1036 = vmatmul.mubr.f32.gmra.mrb[0].mxu0 %v940
      %v1037 = vpop.f32.mrb[0].mxu0
      %v1038 = vadd.f32 %v969, %v1037
      %v1039 = vpop.f32.mrb[0].mxu0
      %1040 = vmatprep.mubr.f32.mxu0 0.0
      %1041 = vmatmul.mubr.f32.gmra.mrb[0].mxu0 %v941
      %v1042 = vpop.f32.mrb[0].mxu0
      %v1043 = vadd.f32 %v969, %v1042
      %v1044 = vpop.f32.mrb[0].mxu0
      %1045 = vmatprep.mubr.f32.mxu0 0.0
      %1046 = vmatmul.mubr.f32.gmra.mrb[0].mxu0 %v942
      %v1047 = vpop.f32.mrb[0].mxu0
      %v1048 = vadd.f32 %v969, %v1047
      %v1049 = vpop.f32.mrb[0].mxu0
      %1050 = vmatprep.mubr.f32.mxu0 0.0
      %1051 = vmatmul.mubr.f32.gmra.mrb[0].mxu0 %v943
      %v1052 = vpop.f32.mrb[0].mxu0
      %v1053 = vadd.f32 %v969, %v1052
      %v1054 = vpop.f32.mrb[0].mxu0
      %1055 = vmatprep.mubr.f32.mxu0 0.0
      %1056 = vmatmul.mubr.f32.gmra.mrb[0].mxu0 %v944
      %v1057 = vpop.f32.mrb[0].mxu0
      %v1058 = vadd.f32 %v969, %v1057
      %v1059 = vpop.f32.mrb[0].mxu0
      %1060 = vmatprep.mubr.f32.mxu0 0.0
      %1061 = vmatmul.mubr.f32.gmra.mrb[0].mxu0 %v945
      %v1062 = vpop.f32.mrb[0].mxu0
      %v1063 = vadd.f32 %v969, %v1062
      %v1064 = vpop.f32.mrb[0].mxu0
      %1065 = vmatprep.mubr.f32.mxu0 0.0
      %1066 = vmatmul.mubr.f32.gmra.mrb[0].mxu0 %v946
      %v1067 = vpop.f32.mrb[0].mxu0
      %v1068 = vadd.f32 %v969, %v1067
      %v1069 = vpop.f32.mrb[0].mxu0
      %1070 = vmatprep.mubr.f32.mxu0 0.0
      %1071 = vmatmul.mubr.f32.gmra.mrb[0].mxu0 %v947
      %v1072 = vpop.f32.mrb[0].mxu0
      %v1073 = vadd.f32 %v969, %v1072
      %v1074 = vpop.f32.mrb[0].mxu0
      %1075 = vdwg.mxu0
      %v1076 = vmax.f32 %v1038, 0.0
      %v1077 = vmax.f32 %v1043, 0.0
      %v1078 = vmax.f32 %v1048, 0.0
      %v1079 = vmax.f32 %v1053, 0.0
      %v1080 = vmax.f32 %v1058, 0.0
      %v1081 = vmax.f32 %v1063, 0.0
      %v1082 = vmax.f32 %v1068, 0.0
      %v1083 = vmax.f32 %v1073, 0.0
      %1084 = vst [vmem:[#allocation4] sm:$0xff] %v1076
      %1085 = vst [vmem:[#allocation4 + $0x8] sm:$0xff] %v1077
      %1086 = vst [vmem:[#allocation4 + $0x10] sm:$0xff] %v1078
      %1087 = vst [vmem:[#allocation4 + $0x18] sm:$0xff] %v1079
      %1088 = vst [vmem:[#allocation4 + $0x20] sm:$0xff] %v1080
      %1089 = vst [vmem:[#allocation4 + $0x28] sm:$0xff] %v1081
      %1090 = vst [vmem:[#allocation4 + $0x30] sm:$0xff] %v1082
      %1091 = vst [vmem:[#allocation4 + $0x38] sm:$0xff] %v1083
    $region53: #{tpu_custom_call.1} parent=1 // pred_fallthru
      _
    %v1092 = vld [vmem:[#allocation4] sm:$0xff]
    %v1093 = vld [vmem:[#allocation4 + $0x8] sm:$0xff]
    %v1094 = vld [vmem:[#allocation4 + $0x10] sm:$0xff]
    %v1095 = vld [vmem:[#allocation4 + $0x18] sm:$0xff]
    %v1096 = vld [vmem:[#allocation4 + $0x20] sm:$0xff]
    %v1097 = vld [vmem:[#allocation4 + $0x28] sm:$0xff]
    %v1098 = vld [vmem:[#allocation4 + $0x30] sm:$0xff]
    %v1099 = vld [vmem:[#allocation4 + $0x38] sm:$0xff]
    %v1100 = vld [vmem:[#allocation13] sm:$0xff]
    %v1101 = vld [vmem:[#allocation13 + $0x8] sm:$0xff]
    %v1102 = vld [vmem:[#allocation13 + $0x10] sm:$0xff]
    %v1103 = vld [vmem:[#allocation13 + $0x18] sm:$0xff]
    %v1104 = vld [vmem:[#allocation13 + $0x20] sm:$0xff]
    %v1105 = vld [vmem:[#allocation13 + $0x28] sm:$0xff]
    %v1106 = vld [vmem:[#allocation13 + $0x30] sm:$0xff]
    %v1107 = vld [vmem:[#allocation13 + $0x38] sm:$0xff]
    %v1108 = vld [vmem:[#allocation13 + $0x40] sm:$0xff]
    %v1109 = vld [vmem:[#allocation13 + $0x48] sm:$0xff]
    %v1110 = vld [vmem:[#allocation13 + $0x50] sm:$0xff]
    %v1111 = vld [vmem:[#allocation13 + $0x58] sm:$0xff]
    %v1112 = vld [vmem:[#allocation13 + $0x60] sm:$0xff]
    %v1113 = vld [vmem:[#allocation13 + $0x68] sm:$0xff]
    %v1114 = vld [vmem:[#allocation13 + $0x70] sm:$0xff]
    %v1115 = vld [vmem:[#allocation13 + $0x78] sm:$0xff]
    %v1116 = vld [vmem:[#allocation13 + $0x80] sm:$0xff]
    %v1117 = vld [vmem:[#allocation13 + $0x88] sm:$0xff]
    %v1118 = vld [vmem:[#allocation13 + $0x90] sm:$0xff]
    %v1119 = vld [vmem:[#allocation13 + $0x98] sm:$0xff]
    %v1120 = vld [vmem:[#allocation13 + $0xa0] sm:$0xff]
    %v1121 = vld [vmem:[#allocation13 + $0xa8] sm:$0xff]
    %v1122 = vld [vmem:[#allocation13 + $0xb0] sm:$0xff]
    %v1123 = vld [vmem:[#allocation13 + $0xb8] sm:$0xff]
    %v1124 = vld [vmem:[#allocation13 + $0xc0] sm:$0xff]
    %v1125 = vld [vmem:[#allocation13 + $0xc8] sm:$0xff]
    %v1126 = vld [vmem:[#allocation13 + $0xd0] sm:$0xff]
    %v1127 = vld [vmem:[#allocation13 + $0xd8] sm:$0xff]
    %v1128 = vld [vmem:[#allocation13 + $0xe0] sm:$0xff]
    %v1129 = vld [vmem:[#allocation13 + $0xe8] sm:$0xff]
    %v1130 = vld [vmem:[#allocation13 + $0xf0] sm:$0xff]
    %v1131 = vld [vmem:[#allocation13 + $0xf8] sm:$0xff]
    %1132 = vmatprep.subr.mxu0 %v1101
    %1133 = vmatpush1.msra.mxu0 %v1100
    %1134 = vmatprep.subr.mxu0 %v1103
    %1135 = vmatpush1.msra.mxu0 %v1102
    %1136 = vmatprep.subr.mxu0 %v1105
    %1137 = vmatpush1.msra.mxu0 %v1104
    %1138 = vmatprep.subr.mxu0 %v1107
    %1139 = vmatpush1.msra.mxu0 %v1106
    %1140 = vmatprep.subr.mxu0 %v1109
    %1141 = vmatpush1.msra.mxu0 %v1108
    %1142 = vmatprep.subr.mxu0 %v1111
    %1143 = vmatpush1.msra.mxu0 %v1110
    %1144 = vmatprep.subr.mxu0 %v1113
    %1145 = vmatpush1.msra.mxu0 %v1112
    %1146 = vmatprep.subr.mxu0 %v1115
    %1147 = vmatpush1.msra.mxu0 %v1114
    %1148 = vmatprep.subr.mxu0 %v1117
    %1149 = vmatpush1.msra.mxu0 %v1116
    %1150 = vmatprep.subr.mxu0 %v1119
    %1151 = vmatpush1.msra.mxu0 %v1118
    %1152 = vmatprep.subr.mxu0 %v1121
    %1153 = vmatpush1.msra.mxu0 %v1120
    %1154 = vmatprep.subr.mxu0 %v1123
    %1155 = vmatpush1.msra.mxu0 %v1122
    %1156 = vmatprep.subr.mxu0 %v1125
    %1157 = vmatpush1.msra.mxu0 %v1124
    %1158 = vmatprep.subr.mxu0 %v1127
    %1159 = vmatpush1.msra.mxu0 %v1126
    %1160 = vmatprep.subr.mxu0 %v1129
    %1161 = vmatpush1.msra.mxu0 %v1128
    %1162 = vmatprep.subr.mxu0 %v1131
    %1163 = vmatpush1.msra.mxu0 %v1130
    %1164 = vmatprep.subr.mxu0 0.0
    %1165 = vmatpush1.msra.mxu0 0.0
    %1166 = vmatprep.subr.mxu0 0.0
    %1167 = vmatpush1.msra.mxu0 0.0
    %1168 = vmatprep.subr.mxu0 0.0
    %1169 = vmatpush1.msra.mxu0 0.0
    %1170 = vmatprep.subr.mxu0 0.0
    %1171 = vmatpush1.msra.mxu0 0.0
    %1172 = vmatprep.subr.mxu0 0.0
    %1173 = vmatpush1.msra.mxu0 0.0
    %1174 = vmatprep.subr.mxu0 0.0
    %1175 = vmatpush1.msra.mxu0 0.0
    %1176 = vmatprep.subr.mxu0 0.0
    %1177 = vmatpush1.msra.mxu0 0.0
    %1178 = vmatprep.subr.mxu0 0.0
    %1179 = vmatpush1.msra.mxu0 0.0
    %1180 = vmatprep.subr.mxu0 0.0
    %1181 = vmatpush1.msra.mxu0 0.0
    %1182 = vmatprep.subr.mxu0 0.0
    %1183 = vmatpush1.msra.mxu0 0.0
    %1184 = vmatprep.subr.mxu0 0.0
    %1185 = vmatpush1.msra.mxu0 0.0
    %1186 = vmatprep.subr.mxu0 0.0
    %1187 = vmatpush1.msra.mxu0 0.0
    %1188 = vmatprep.subr.mxu0 0.0
    %1189 = vmatpush1.msra.mxu0 0.0
    %1190 = vmatprep.subr.mxu0 0.0
    %1191 = vmatpush1.msra.mxu0 0.0
    %1192 = vmatprep.subr.mxu0 0.0
    %1193 = vmatpush1.msra.mxu0 0.0
    %1194 = vmatprep.subr.mxu0 0.0
    %1195 = vmatpush1.msra.mxu0 0.0
    %1196 = vmatprep.mubr.f32.mxu0 0.0
    %1197 = vmatmul.mubr.f32.gmra.mrb[0].mxu0 %v1092
    %v1198 = vpop.f32.mrb[0].mxu0
    %v1199 = vadd.f32 0.0, %v1198
    %v1200 = vpop.f32.mrb[0].mxu0
    %v1201 = vadd.f32 0.0, %v1200
    %1202 = vmatprep.mubr.f32.mxu0 0.0
    %1203 = vmatmul.mubr.f32.gmra.mrb[0].mxu0 %v1093
    %v1204 = vpop.f32.mrb[0].mxu0
    %v1205 = vadd.f32 0.0, %v1204
    %v1206 = vpop.f32.mrb[0].mxu0
    %v1207 = vadd.f32 0.0, %v1206
    %1208 = vmatprep.mubr.f32.mxu0 0.0
    %1209 = vmatmul.mubr.f32.gmra.mrb[0].mxu0 %v1094
    %v1210 = vpop.f32.mrb[0].mxu0
    %v1211 = vadd.f32 0.0, %v1210
    %v1212 = vpop.f32.mrb[0].mxu0
    %v1213 = vadd.f32 0.0, %v1212
    %1214 = vmatprep.mubr.f32.mxu0 0.0
    %1215 = vmatmul.mubr.f32.gmra.mrb[0].mxu0 %v1095
    %v1216 = vpop.f32.mrb[0].mxu0
    %v1217 = vadd.f32 0.0, %v1216
    %v1218 = vpop.f32.mrb[0].mxu0
    %v1219 = vadd.f32 0.0, %v1218
    %1220 = vmatprep.mubr.f32.mxu0 0.0
    %1221 = vmatmul.mubr.f32.gmra.mrb[0].mxu0 %v1096
    %v1222 = vpop.f32.mrb[0].mxu0
    %v1223 = vadd.f32 0.0, %v1222
    %v1224 = vpop.f32.mrb[0].mxu0
    %v1225 = vadd.f32 0.0, %v1224
    %1226 = vmatprep.mubr.f32.mxu0 0.0
    %1227 = vmatmul.mubr.f32.gmra.mrb[0].mxu0 %v1097
    %v1228 = vpop.f32.mrb[0].mxu0
    %v1229 = vadd.f32 0.0, %v1228
    %v1230 = vpop.f32.mrb[0].mxu0
    %v1231 = vadd.f32 0.0, %v1230
    %1232 = vmatprep.mubr.f32.mxu0 0.0
    %1233 = vmatmul.mubr.f32.gmra.mrb[0].mxu0 %v1098
    %v1234 = vpop.f32.mrb[0].mxu0
    %v1235 = vadd.f32 0.0, %v1234
    %v1236 = vpop.f32.mrb[0].mxu0
    %v1237 = vadd.f32 0.0, %v1236
    %1238 = vmatprep.mubr.f32.mxu0 0.0
    %1239 = vmatmul.mubr.f32.gmra.mrb[0].mxu0 %v1099
    %v1240 = vpop.f32.mrb[0].mxu0
    %v1241 = vadd.f32 0.0, %v1240
    %v1242 = vpop.f32.mrb[0].mxu0
    %v1243 = vadd.f32 0.0, %v1242
    %1244 = vdwg.mxu0
    %1245 = vst [vmem:[#allocation14] sm:$0xff] %v1199
    %1246 = vst [vmem:[#allocation14 + $0x8] sm:$0xff] %v1201
    %1247 = vst [vmem:[#allocation14 + $0x10] sm:$0xff] %v1205
    %1248 = vst [vmem:[#allocation14 + $0x18] sm:$0xff] %v1207
    %1249 = vst [vmem:[#allocation14 + $0x20] sm:$0xff] %v1211
    %1250 = vst [vmem:[#allocation14 + $0x28] sm:$0xff] %v1213
    %1251 = vst [vmem:[#allocation14 + $0x30] sm:$0xff] %v1217
    %1252 = vst [vmem:[#allocation14 + $0x38] sm:$0xff] %v1219
    %1253 = vst [vmem:[#allocation14 + $0x40] sm:$0xff] %v1223
    %1254 = vst [vmem:[#allocation14 + $0x48] sm:$0xff] %v1225
    %1255 = vst [vmem:[#allocation14 + $0x50] sm:$0xff] %v1229
    %1256 = vst [vmem:[#allocation14 + $0x58] sm:$0xff] %v1231
    %1257 = vst [vmem:[#allocation14 + $0x60] sm:$0xff] %v1235
    %1258 = vst [vmem:[#allocation14 + $0x68] sm:$0xff] %v1237
    %1259 = vst [vmem:[#allocation14 + $0x70] sm:$0xff] %v1241
    %1260 = vst [vmem:[#allocation14 + $0x78] sm:$0xff] %v1243
    // Predicated region
    $region54: #{tpu_custom_call.1} parent=1 // pred_check
      _
    $region55: #{tpu_custom_call.1} parent=1 // pred_check_branch
      %1262 = sbr.rel (0) target = $region57
    $region56: #{tpu_custom_call.1} parent=1 // pred_region
      %s1264 = ssub.s32 2048, 2048
      %1265 = vsyncadd [#allocation7], %s1264
      %s1266 = sshll.u32 [#allocation14], 4
      %s1267 = int_to_ptr.vmem [resolvable:$true] %s1266
      %1272 = dma.vmem_to_hbm [thread:$0]  %s1267, 2048, %s7, [#allocation7], 256, 256, 16
    $region57: #{tpu_custom_call.1} parent=1 // pred_fallthru
      _
    // Predicated region
    $region58: #{tpu_custom_call.1} parent=1 // pred_check
      _
    $region59: #{tpu_custom_call.1} parent=1 // pred_check_branch
      %1274 = sbr.rel (0) target = $region61
    $region60: #{tpu_custom_call.1} parent=1 // pred_region
      %1275 = dma.done [#allocation7], 2048
    $region61: #{tpu_custom_call.1} parent=1 // pred_fallthru
      _
    %1276 = vsyncpa [#allocation6], 1
    %1277 = vsyncpa [#allocation9], 1
    %1278 = vsyncpa [#allocation12], 1
    %1279 = vsyncpa [#allocation7], 1

</llo_original>
